<compile_context>
chip_gen: v5e
topology: v5e:2x2
jax: 0.10.0
libtpu: 0.0.40
codegen_flags: <defaults>
</compile_context>

<pallas_src>
import math

import jax
import jax.numpy as jnp
from jax.experimental import pallas as pl
from jax.experimental.pallas import tpu as pltpu

# ----------------------------- config (small) ------------------------------
VOCAB = 100
HIDDEN = 32
N_HEADS = 4
HEAD_DIM = HIDDEN // N_HEADS
N_LAYERS = 2
INTERMEDIATE = 64
MAX_POS = 24            # >= seq + padding_idx + 2
TYPE_VOCAB = 1
NUM_LABELS = 2
PAD_IDX = 1             # RoBERTa padding idx
LN_EPS = 1e-5


# --------------------------- fused forward kernel ---------------------------
def _roberta_kernel(emb_ref, mask_ref,
                    embln_ref, qkvw_ref, qkvb_ref, ow_ref, vech_ref,
                    f1w_ref, f1b_ref, f2w_ref,
                    clsw_ref, clsb_ref, outw_ref, outb_ref,
                    logits_ref):
    """One grid step == one block of TB sequences.  Everything stays in VMEM."""
    f32 = jnp.float32
    bf16 = jnp.bfloat16
    TB, S, H = emb_ref.shape
    inv_sqrt2 = 1.0 / math.sqrt(2.0)
    scale = 1.0 / math.sqrt(HEAD_DIM)

    def layer_norm(x, g, b):
        mu = jnp.mean(x, axis=-1, keepdims=True)
        xc = x - mu
        var = jnp.mean(xc * xc, axis=-1, keepdims=True)
        return xc * jax.lax.rsqrt(var + LN_EPS) * g + b

    def mm(x, w):  # bf16 MXU operands, f32 accumulation
        return jnp.dot(x.astype(bf16), w.astype(bf16), preferred_element_type=f32)

    # --- embeddings: LayerNorm only (RoBERTa has no pre-residual here) ---
    h = emb_ref[...].astype(f32).reshape(TB * S, H)              # (TB*S, H)
    h = layer_norm(h, embln_ref[0:1, :], embln_ref[1:2, :])

    # additive attention mask computed in-kernel from the raw (TB, 1, S) mask
    mask_add = (1.0 - mask_ref[...].astype(f32)) * -10000.0      # (TB, 1, S)

    for l in range(N_LAYERS):                                    # unrolled (2)
        vec = vech_ref[l]                                        # (6, H) f32
        # --- self attention: fused QKV projection, one matmul ---
        qkv = mm(h, qkvw_ref[l]) + qkvb_ref[l]                   # (TB*S, 3H)
        q = qkv[:, 0:H].reshape(TB, S, H)
        k = qkv[:, H:2 * H].reshape(TB, S, H)
        v = qkv[:, 2 * H:3 * H].reshape(TB, S, H)

        ctx_heads = []
        for hd in range(N_HEADS):                                # unrolled (4)
            lo = hd * HEAD_DIM
            qh = q[:, :, lo:lo + HEAD_DIM]                       # (TB, S, D)
            kh = k[:, :, lo:lo + HEAD_DIM]
            vh = v[:, :, lo:lo + HEAD_DIM]
            s = jnp.einsum('bqd,bkd->bqk', qh.astype(bf16), kh.astype(bf16),
                           preferred_element_type=f32) * scale + mask_add
            s = s - jnp.max(s, axis=-1, keepdims=True)
            p = jnp.exp(s)
            p = p * pl.reciprocal(jnp.sum(p, axis=-1, keepdims=True), approx=True)
            ctx_heads.append(
                jnp.einsum('bqk,bkd->bqd', p.astype(bf16), vh.astype(bf16),
                           preferred_element_type=f32))          # (TB, S, D)

        # merge heads + ONE output projection (no per-head weight slicing)
        ctx = jnp.concatenate(ctx_heads, axis=-1).reshape(TB * S, H)
        attn = mm(ctx, ow_ref[l]) + vec[0:1, :]                  # + o_b
        h = layer_norm(attn + h, vec[1:2, :], vec[2:3, :])       # ln1

        # --- feed forward (exact erf gelu, as in HF RoBERTa) ---
        f = mm(h, f1w_ref[l]) + f1b_ref[l]                       # (TB*S, I)
        f = 0.5 * f * (1.0 + jax.lax.erf(f * inv_sqrt2))
        f = mm(f, f2w_ref[l]) + vec[3:4, :]                      # + ffn2_b
        h = layer_norm(f + h, vec[4:5, :], vec[5:6, :])          # ln2

    # --- classification head on the <s>/CLS token of each sequence ---
    cls = h.reshape(TB, S, H)[:, 0:1, :].reshape(TB, H)
    cls = jnp.tanh(mm(cls, clsw_ref[...]) + clsb_ref[...])
    logits = mm(cls, outw_ref[...]) + outb_ref[...]              # (TB, NUM_LABELS)
    logits_ref[0] = logits.astype(logits_ref.dtype)


def _replicated_spec(shape):
    zeros = (0,) * len(shape)
    return pl.BlockSpec(shape, lambda b, z=zeros: z)


def fused_roberta(emb, mask, params, tb=None):
    """emb: (B, S, HIDDEN) summed embeddings; mask: (B, 1, S) float mask."""
    B, S, _ = emb.shape
    if tb is None:
        # keep >= 2 grid steps when possible so both v7x TCs get work; each
        # step still batches ceil(B/2) sequences (one big step on tiny B is
        # within noise on single-TC v5e/v6e).
        nb = 2 if B >= 2 else 1
        tb = -(-B // nb)
    nb = -(-B // tb)
    b_pad = nb * tb
    if b_pad != B:
        pad = b_pad - B
        emb = jnp.pad(emb, ((0, pad), (0, 0), (0, 0)))
        mask = jnp.pad(mask, ((0, pad), (0, 0), (0, 0)))   # padded rows masked out

    weight_args = (
        params["emb_ln"],
        params["qkv_w"], params["qkv_b"],
        params["o_w"], params["vec_h"],
        params["ffn1_w"], params["ffn1_b"], params["ffn2_w"],
        params["cls_w"], params["cls_b"],
        params["out_w"], params["out_b"],
    )
    in_specs = [
        pl.BlockSpec((tb, S, HIDDEN), lambda b: (b, 0, 0)),      # embeddings
        pl.BlockSpec((tb, 1, S), lambda b: (b, 0, 0)),           # attention mask
    ] + [_replicated_spec(w.shape) for w in weight_args]

    out = pl.pallas_call(
        _roberta_kernel,
        out_shape=jax.ShapeDtypeStruct((nb, tb, NUM_LABELS), jnp.float32),
        grid=(nb,),
        in_specs=in_specs,
        out_specs=pl.BlockSpec((1, tb, NUM_LABELS), lambda b: (b, 0, 0)),
        compiler_params=pltpu.CompilerParams(
            dimension_semantics=("parallel",)),
    )(emb, mask, *weight_args)
    return out.reshape(b_pad, NUM_LABELS)[:B]


# ------------------------------ parameters ----------------------------------
def init_params(key):
    def nrm(key, shape, dtype=jnp.bfloat16):
        return (0.02 * jax.random.normal(key, shape)).astype(dtype)

    keys = iter(jax.random.split(key, 32))
    L, H, I = N_LAYERS, HIDDEN, INTERMEDIATE
    f32 = jnp.float32
    ones = lambda s: jnp.ones(s, f32)
    zeros = lambda s: jnp.zeros(s, f32)

    # per-layer H-wide bias / LN vectors packed into one slab:
    # rows: 0=o_b, 1=ln1_g, 2=ln1_b, 3=ffn2_b, 4=ln2_g, 5=ln2_b
    vec_h = jnp.concatenate(
        [zeros((L, 1, H)), ones((L, 1, H)), zeros((L, 1, H)),
         zeros((L, 1, H)), ones((L, 1, H)), zeros((L, 1, H))], axis=1)

    return {
        # embedding tables (gathered in XLA glue; kept f32)
        "word_emb": nrm(next(keys), (VOCAB, H), f32),
        "pos_emb": nrm(next(keys), (MAX_POS, H), f32),
        "type_emb": nrm(next(keys), (TYPE_VOCAB, H), f32),
        # embedding LayerNorm: row0 = gamma, row1 = beta
        "emb_ln": jnp.concatenate([ones((1, H)), zeros((1, H))], axis=0),
        # per-layer matmul weights (bf16 for the MXU), Q/K/V fused
        "qkv_w": nrm(next(keys), (L, H, 3 * H)),
        "qkv_b": zeros((L, 1, 3 * H)),
        "o_w": nrm(next(keys), (L, H, H)),
        "vec_h": vec_h,
        "ffn1_w": nrm(next(keys), (L, H, I)),
        "ffn1_b": zeros((L, 1, I)),
        "ffn2_w": nrm(next(keys), (L, I, H)),
        # classification head
        "cls_w": nrm(next(keys), (H, H)),
        "cls_b": zeros((1, H)),
        "out_w": nrm(next(keys), (H, NUM_LABELS)),
        "out_b": zeros((1, NUM_LABELS)),
    }


# ------------------------------ forward pass ---------------------------------
def roberta_forward(params, input_ids, attention_mask):
    """Equivalent of RoBERTa.forward({'input_ids', 'attention_mask'}, device)."""
    B, S = input_ids.shape

    # embedding gathers (XLA glue; tables are tiny, in-kernel gather loses)
    not_pad = (input_ids != PAD_IDX).astype(jnp.int32)
    position_ids = jnp.cumsum(not_pad, axis=1) * not_pad + PAD_IDX
    word_e = params["word_emb"][input_ids]
    pos_e = params["pos_emb"][position_ids]
    type_e = params["type_emb"][jnp.zeros_like(input_ids)]
    emb = (word_e + pos_e + type_e).astype(jnp.float32)          # (B, S, HIDDEN)

    mask_f = attention_mask.astype(jnp.float32).reshape(B, 1, S)

    logits = fused_roberta(emb, mask_f, params)

    # Mimics SequenceClassifierOutput (no labels -> loss is None)
    return {"logits": logits}


# TODO(synk): pretrained 'roberta-base' checkpoint loading has no Pallas
#             equivalent; weights are deterministic synthetic initializations.

if __name__ == "__main__":
    key = jax.random.PRNGKey(0)
    pkey, dkey = jax.random.split(key)

    B, S = 2, 8
    params = init_params(pkey)
    input_ids = jax.random.randint(dkey, (B, S), minval=PAD_IDX + 2, maxval=VOCAB,
                                   dtype=jnp.int32)
    attention_mask = jnp.ones((B, S), dtype=jnp.int32)

    fwd = jax.jit(roberta_forward)
    out = fwd(params, input_ids, attention_mask)
    jax.block_until_ready(out["logits"])
    assert out["logits"].shape == (B, NUM_LABELS)
    assert bool(jnp.all(jnp.isfinite(out["logits"])))
    print("KERNEL_OK")
</pallas_src>

<mosaic_0001>
module attributes {stable_mosaic.version = 11 : i64} {
  func.func @_roberta_kernel(%arg0: i32, %arg1: memref<1x8x32xf32, #tpu.memory_space<vmem>>, %arg2: memref<1x1x8xf32, #tpu.memory_space<vmem>>, %arg3: memref<2x32xf32, #tpu.memory_space<vmem>>, %arg4: memref<2x32x96xbf16, #tpu.memory_space<vmem>>, %arg5: memref<2x1x96xf32, #tpu.memory_space<vmem>>, %arg6: memref<2x32x32xbf16, #tpu.memory_space<vmem>>, %arg7: memref<2x6x32xf32, #tpu.memory_space<vmem>>, %arg8: memref<2x32x64xbf16, #tpu.memory_space<vmem>>, %arg9: memref<2x1x64xf32, #tpu.memory_space<vmem>>, %arg10: memref<2x64x32xbf16, #tpu.memory_space<vmem>>, %arg11: memref<32x32xbf16, #tpu.memory_space<vmem>>, %arg12: memref<1x32xf32, #tpu.memory_space<vmem>>, %arg13: memref<32x2xbf16, #tpu.memory_space<vmem>>, %arg14: memref<1x2xf32, #tpu.memory_space<vmem>>, %arg15: memref<1x1x2xf32, #tpu.memory_space<vmem>>) attributes {dimension_semantics = [#tpu.dimension_semantics<parallel>], iteration_bounds = array<i64: 2>, scalar_prefetch = 0 : i64, scratch_operands = 0 : i64, tpu.core_type = #tpu.core_type<tc>, window_params = [{transform_indices = @transform_0, window_bounds = array<i64: 1, 8, 32>}, {transform_indices = @transform_1, window_bounds = array<i64: 1, 1, 8>}, {pipeline_mode = #tpu.pipeline_mode<synchronous>, transform_indices = @transform_2, window_bounds = array<i64: 2, 32>}, {pipeline_mode = #tpu.pipeline_mode<synchronous>, transform_indices = @transform_3, window_bounds = array<i64: 2, 32, 96>}, {pipeline_mode = #tpu.pipeline_mode<synchronous>, transform_indices = @transform_4, window_bounds = array<i64: 2, 1, 96>}, {pipeline_mode = #tpu.pipeline_mode<synchronous>, transform_indices = @transform_5, window_bounds = array<i64: 2, 32, 32>}, {pipeline_mode = #tpu.pipeline_mode<synchronous>, transform_indices = @transform_6, window_bounds = array<i64: 2, 6, 32>}, {pipeline_mode = #tpu.pipeline_mode<synchronous>, transform_indices = @transform_7, window_bounds = array<i64: 2, 32, 64>}, {pipeline_mode = #tpu.pipeline_mode<synchronous>, transform_indices = @transform_8, window_bounds = array<i64: 2, 1, 64>}, {pipeline_mode = #tpu.pipeline_mode<synchronous>, transform_indices = @transform_9, window_bounds = array<i64: 2, 64, 32>}, {pipeline_mode = #tpu.pipeline_mode<synchronous>, transform_indices = @transform_10, window_bounds = array<i64: 32, 32>}, {pipeline_mode = #tpu.pipeline_mode<synchronous>, transform_indices = @transform_11, window_bounds = array<i64: 1, 32>}, {pipeline_mode = #tpu.pipeline_mode<synchronous>, transform_indices = @transform_12, window_bounds = array<i64: 32, 2>}, {pipeline_mode = #tpu.pipeline_mode<synchronous>, transform_indices = @transform_13, window_bounds = array<i64: 1, 2>}, {transform_indices = @transform_14, window_bounds = array<i64: 1, 1, 2>}]} {
    %c0 = arith.constant 0 : index
    %c0_0 = arith.constant 0 : index
    %c0_1 = arith.constant 0 : index
    %0 = vector.load %arg1[%c0, %c0_0, %c0_1] : memref<1x8x32xf32, #tpu.memory_space<vmem>>, vector<1x8x32xf32>
    %1 = vector.shape_cast %0 : vector<1x8x32xf32> to vector<8x32xf32>
    %c0_2 = arith.constant 0 : index
    %c0_3 = arith.constant 0 : index
    %2 = vector.load %arg3[%c0_2, %c0_3] : memref<2x32xf32, #tpu.memory_space<vmem>>, vector<1x32xf32>
    %c1 = arith.constant 1 : index
    %c0_4 = arith.constant 0 : index
    %3 = vector.load %arg3[%c1, %c0_4] : memref<2x32xf32, #tpu.memory_space<vmem>>, vector<1x32xf32>
    %cst = arith.constant dense<0.000000e+00> : vector<8xf32>
    %4 = vector.multi_reduction <add>, %1, %cst [1] : vector<8x32xf32> to vector<8xf32>
    %5 = vector.shape_cast %4 : vector<8xf32> to vector<8x1xf32>
    %cst_5 = arith.constant 3.200000e+01 : f32
    %6 = vector.broadcast %cst_5 : f32 to vector<8x1xf32>
    %7 = arith.divf %5, %6 : vector<8x1xf32>
    %8 = vector.broadcast %7 : vector<8x1xf32> to vector<8x32xf32>
    %9 = arith.subf %1, %8 : vector<8x32xf32>
    %10 = arith.mulf %9, %9 : vector<8x32xf32>
    %cst_6 = arith.constant dense<0.000000e+00> : vector<8xf32>
    %11 = vector.multi_reduction <add>, %10, %cst_6 [1] : vector<8x32xf32> to vector<8xf32>
    %12 = vector.shape_cast %11 : vector<8xf32> to vector<8x1xf32>
    %cst_7 = arith.constant 3.200000e+01 : f32
    %13 = vector.broadcast %cst_7 : f32 to vector<8x1xf32>
    %14 = arith.divf %12, %13 : vector<8x1xf32>
    %cst_8 = arith.constant 9.99999974E-6 : f32
    %15 = vector.broadcast %cst_8 : f32 to vector<8x1xf32>
    %16 = arith.addf %14, %15 : vector<8x1xf32>
    %17 = math.rsqrt %16 : vector<8x1xf32>
    %18 = vector.broadcast %17 : vector<8x1xf32> to vector<8x32xf32>
    %19 = arith.mulf %9, %18 : vector<8x32xf32>
    %20 = vector.broadcast %2 : vector<1x32xf32> to vector<8x32xf32>
    %21 = arith.mulf %19, %20 : vector<8x32xf32>
    %22 = vector.broadcast %3 : vector<1x32xf32> to vector<8x32xf32>
    %23 = arith.addf %21, %22 : vector<8x32xf32>
    %c0_9 = arith.constant 0 : index
    %c0_10 = arith.constant 0 : index
    %c0_11 = arith.constant 0 : index
    %24 = vector.load %arg2[%c0_9, %c0_10, %c0_11] : memref<1x1x8xf32, #tpu.memory_space<vmem>>, vector<1x1x8xf32>
    %cst_12 = arith.constant 1.000000e+00 : f32
    %25 = vector.broadcast %cst_12 : f32 to vector<1x1x8xf32>
    %26 = arith.subf %25, %24 : vector<1x1x8xf32>
    %cst_13 = arith.constant -1.000000e+04 : f32
    %27 = vector.broadcast %cst_13 : f32 to vector<1x1x8xf32>
    %28 = arith.mulf %26, %27 : vector<1x1x8xf32>
    %c0_14 = arith.constant 0 : index
    %c0_15 = arith.constant 0 : index
    %c0_16 = arith.constant 0 : index
    %29 = vector.load %arg7[%c0_14, %c0_15, %c0_16] : memref<2x6x32xf32, #tpu.memory_space<vmem>>, vector<1x6x32xf32>
    %30 = vector.shape_cast %29 : vector<1x6x32xf32> to vector<6x32xf32>
    %c0_17 = arith.constant 0 : index
    %c0_18 = arith.constant 0 : index
    %c0_19 = arith.constant 0 : index
    %31 = vector.load %arg4[%c0_17, %c0_18, %c0_19] : memref<2x32x96xbf16, #tpu.memory_space<vmem>>, vector<1x32x96xbf16>
    %32 = vector.shape_cast %31 : vector<1x32x96xbf16> to vector<32x96xbf16>
    %33 = arith.truncf %23 : vector<8x32xf32> to vector<8x32xbf16>
    %cst_20 = arith.constant dense<0.000000e+00> : vector<8x96xf32>
    %34 = tpu.matmul %33, %32, %cst_20 {dimension_numbers = #tpu.dot_dimension_numbers<[1], [0], [0], [1], [0, 0, 1, 1], [], []>} : vector<8x32xbf16>, vector<32x96xbf16>, vector<8x96xf32> -> vector<8x96xf32>
    %c0_21 = arith.constant 0 : index
    %c0_22 = arith.constant 0 : index
    %c0_23 = arith.constant 0 : index
    %35 = vector.load %arg5[%c0_21, %c0_22, %c0_23] : memref<2x1x96xf32, #tpu.memory_space<vmem>>, vector<1x1x96xf32>
    %36 = vector.shape_cast %35 : vector<1x1x96xf32> to vector<1x96xf32>
    %37 = vector.broadcast %36 : vector<1x96xf32> to vector<8x96xf32>
    %38 = arith.addf %34, %37 : vector<8x96xf32>
    %39 = vector.extract_strided_slice %38 {offsets = [0, 0], sizes = [8, 32], strides = [1, 1]} : vector<8x96xf32> to vector<8x32xf32>
    %40 = vector.shape_cast %39 : vector<8x32xf32> to vector<1x8x32xf32>
    %41 = vector.extract_strided_slice %38 {offsets = [0, 32], sizes = [8, 32], strides = [1, 1]} : vector<8x96xf32> to vector<8x32xf32>
    %42 = vector.shape_cast %41 : vector<8x32xf32> to vector<1x8x32xf32>
    %43 = vector.extract_strided_slice %38 {offsets = [0, 64], sizes = [8, 32], strides = [1, 1]} : vector<8x96xf32> to vector<8x32xf32>
    %44 = vector.shape_cast %43 : vector<8x32xf32> to vector<1x8x32xf32>
    %45 = vector.extract_strided_slice %40 {offsets = [0, 0, 0], sizes = [1, 8, 8], strides = [1, 1, 1]} : vector<1x8x32xf32> to vector<1x8x8xf32>
    %46 = vector.extract_strided_slice %42 {offsets = [0, 0, 0], sizes = [1, 8, 8], strides = [1, 1, 1]} : vector<1x8x32xf32> to vector<1x8x8xf32>
    %47 = vector.extract_strided_slice %44 {offsets = [0, 0, 0], sizes = [1, 8, 8], strides = [1, 1, 1]} : vector<1x8x32xf32> to vector<1x8x8xf32>
    %48 = arith.truncf %45 : vector<1x8x8xf32> to vector<1x8x8xbf16>
    %49 = arith.truncf %46 : vector<1x8x8xf32> to vector<1x8x8xbf16>
    "tpu.trace_start"() <{level = 10 : i32, message = "bqd,bkd->bqk"}> : () -> ()
    %cst_24 = arith.constant dense<0.000000e+00> : vector<1x8x8xf32>
    %50 = tpu.matmul %48, %49, %cst_24 {dimension_numbers = #tpu.dot_dimension_numbers<[2], [2], [1], [1], [0, 0, 0, 1, 1, 1], [0], [0]>} : vector<1x8x8xbf16>, vector<1x8x8xbf16>, vector<1x8x8xf32> -> vector<1x8x8xf32>
    "tpu.trace_stop"() : () -> ()
    %cst_25 = arith.constant 0.353553385 : f32
    %51 = vector.broadcast %cst_25 : f32 to vector<1x8x8xf32>
    %52 = arith.mulf %50, %51 : vector<1x8x8xf32>
    %53 = vector.broadcast %28 : vector<1x1x8xf32> to vector<1x8x8xf32>
    %54 = arith.addf %52, %53 : vector<1x8x8xf32>
    %cst_26 = arith.constant dense<0xFF800000> : vector<1x8xf32>
    %55 = vector.multi_reduction <maximumf>, %54, %cst_26 [2] : vector<1x8x8xf32> to vector<1x8xf32>
    %56 = vector.shape_cast %55 : vector<1x8xf32> to vector<1x8x1xf32>
    %57 = vector.broadcast %56 : vector<1x8x1xf32> to vector<1x8x8xf32>
    %58 = arith.subf %54, %57 : vector<1x8x8xf32>
    %59 = math.exp %58 : vector<1x8x8xf32>
    %cst_27 = arith.constant dense<0.000000e+00> : vector<1x8xf32>
    %60 = vector.multi_reduction <add>, %59, %cst_27 [2] : vector<1x8x8xf32> to vector<1x8xf32>
    %61 = vector.shape_cast %60 : vector<1x8xf32> to vector<1x8x1xf32>
    %62 = tpu.reciprocal %61 {approx = true} : vector<1x8x1xf32> -> vector<1x8x1xf32>
    %63 = vector.broadcast %62 : vector<1x8x1xf32> to vector<1x8x8xf32>
    %64 = arith.mulf %59, %63 : vector<1x8x8xf32>
    %65 = arith.truncf %64 : vector<1x8x8xf32> to vector<1x8x8xbf16>
    %66 = arith.truncf %47 : vector<1x8x8xf32> to vector<1x8x8xbf16>
    "tpu.trace_start"() <{level = 10 : i32, message = "bqk,bkd->bqd"}> : () -> ()
    %cst_28 = arith.constant dense<0.000000e+00> : vector<1x8x8xf32>
    %67 = tpu.matmul %65, %66, %cst_28 {dimension_numbers = #tpu.dot_dimension_numbers<[2], [1], [1], [2], [0, 0, 0, 1, 1, 2], [0], [0]>} : vector<1x8x8xbf16>, vector<1x8x8xbf16>, vector<1x8x8xf32> -> vector<1x8x8xf32>
    "tpu.trace_stop"() : () -> ()
    %68 = vector.extract_strided_slice %40 {offsets = [0, 0, 8], sizes = [1, 8, 8], strides = [1, 1, 1]} : vector<1x8x32xf32> to vector<1x8x8xf32>
    %69 = vector.extract_strided_slice %42 {offsets = [0, 0, 8], sizes = [1, 8, 8], strides = [1, 1, 1]} : vector<1x8x32xf32> to vector<1x8x8xf32>
    %70 = vector.extract_strided_slice %44 {offsets = [0, 0, 8], sizes = [1, 8, 8], strides = [1, 1, 1]} : vector<1x8x32xf32> to vector<1x8x8xf32>
    %71 = arith.truncf %68 : vector<1x8x8xf32> to vector<1x8x8xbf16>
    %72 = arith.truncf %69 : vector<1x8x8xf32> to vector<1x8x8xbf16>
    "tpu.trace_start"() <{level = 10 : i32, message = "bqd,bkd->bqk"}> : () -> ()
    %cst_29 = arith.constant dense<0.000000e+00> : vector<1x8x8xf32>
    %73 = tpu.matmul %71, %72, %cst_29 {dimension_numbers = #tpu.dot_dimension_numbers<[2], [2], [1], [1], [0, 0, 0, 1, 1, 1], [0], [0]>} : vector<1x8x8xbf16>, vector<1x8x8xbf16>, vector<1x8x8xf32> -> vector<1x8x8xf32>
    "tpu.trace_stop"() : () -> ()
    %cst_30 = arith.constant 0.353553385 : f32
    %74 = vector.broadcast %cst_30 : f32 to vector<1x8x8xf32>
    %75 = arith.mulf %73, %74 : vector<1x8x8xf32>
    %76 = vector.broadcast %28 : vector<1x1x8xf32> to vector<1x8x8xf32>
    %77 = arith.addf %75, %76 : vector<1x8x8xf32>
    %cst_31 = arith.constant dense<0xFF800000> : vector<1x8xf32>
    %78 = vector.multi_reduction <maximumf>, %77, %cst_31 [2] : vector<1x8x8xf32> to vector<1x8xf32>
    %79 = vector.shape_cast %78 : vector<1x8xf32> to vector<1x8x1xf32>
    %80 = vector.broadcast %79 : vector<1x8x1xf32> to vector<1x8x8xf32>
    %81 = arith.subf %77, %80 : vector<1x8x8xf32>
    %82 = math.exp %81 : vector<1x8x8xf32>
    %cst_32 = arith.constant dense<0.000000e+00> : vector<1x8xf32>
    %83 = vector.multi_reduction <add>, %82, %cst_32 [2] : vector<1x8x8xf32> to vector<1x8xf32>
    %84 = vector.shape_cast %83 : vector<1x8xf32> to vector<1x8x1xf32>
    %85 = tpu.reciprocal %84 {approx = true} : vector<1x8x1xf32> -> vector<1x8x1xf32>
    %86 = vector.broadcast %85 : vector<1x8x1xf32> to vector<1x8x8xf32>
    %87 = arith.mulf %82, %86 : vector<1x8x8xf32>
    %88 = arith.truncf %87 : vector<1x8x8xf32> to vector<1x8x8xbf16>
    %89 = arith.truncf %70 : vector<1x8x8xf32> to vector<1x8x8xbf16>
    "tpu.trace_start"() <{level = 10 : i32, message = "bqk,bkd->bqd"}> : () -> ()
    %cst_33 = arith.constant dense<0.000000e+00> : vector<1x8x8xf32>
    %90 = tpu.matmul %88, %89, %cst_33 {dimension_numbers = #tpu.dot_dimension_numbers<[2], [1], [1], [2], [0, 0, 0, 1, 1, 2], [0], [0]>} : vector<1x8x8xbf16>, vector<1x8x8xbf16>, vector<1x8x8xf32> -> vector<1x8x8xf32>
    "tpu.trace_stop"() : () -> ()
    %91 = vector.extract_strided_slice %40 {offsets = [0, 0, 16], sizes = [1, 8, 8], strides = [1, 1, 1]} : vector<1x8x32xf32> to vector<1x8x8xf32>
    %92 = vector.extract_strided_slice %42 {offsets = [0, 0, 16], sizes = [1, 8, 8], strides = [1, 1, 1]} : vector<1x8x32xf32> to vector<1x8x8xf32>
    %93 = vector.extract_strided_slice %44 {offsets = [0, 0, 16], sizes = [1, 8, 8], strides = [1, 1, 1]} : vector<1x8x32xf32> to vector<1x8x8xf32>
    %94 = arith.truncf %91 : vector<1x8x8xf32> to vector<1x8x8xbf16>
    %95 = arith.truncf %92 : vector<1x8x8xf32> to vector<1x8x8xbf16>
    "tpu.trace_start"() <{level = 10 : i32, message = "bqd,bkd->bqk"}> : () -> ()
    %cst_34 = arith.constant dense<0.000000e+00> : vector<1x8x8xf32>
    %96 = tpu.matmul %94, %95, %cst_34 {dimension_numbers = #tpu.dot_dimension_numbers<[2], [2], [1], [1], [0, 0, 0, 1, 1, 1], [0], [0]>} : vector<1x8x8xbf16>, vector<1x8x8xbf16>, vector<1x8x8xf32> -> vector<1x8x8xf32>
    "tpu.trace_stop"() : () -> ()
    %cst_35 = arith.constant 0.353553385 : f32
    %97 = vector.broadcast %cst_35 : f32 to vector<1x8x8xf32>
    %98 = arith.mulf %96, %97 : vector<1x8x8xf32>
    %99 = vector.broadcast %28 : vector<1x1x8xf32> to vector<1x8x8xf32>
    %100 = arith.addf %98, %99 : vector<1x8x8xf32>
    %cst_36 = arith.constant dense<0xFF800000> : vector<1x8xf32>
    %101 = vector.multi_reduction <maximumf>, %100, %cst_36 [2] : vector<1x8x8xf32> to vector<1x8xf32>
    %102 = vector.shape_cast %101 : vector<1x8xf32> to vector<1x8x1xf32>
    %103 = vector.broadcast %102 : vector<1x8x1xf32> to vector<1x8x8xf32>
    %104 = arith.subf %100, %103 : vector<1x8x8xf32>
    %105 = math.exp %104 : vector<1x8x8xf32>
    %cst_37 = arith.constant dense<0.000000e+00> : vector<1x8xf32>
    %106 = vector.multi_reduction <add>, %105, %cst_37 [2] : vector<1x8x8xf32> to vector<1x8xf32>
    %107 = vector.shape_cast %106 : vector<1x8xf32> to vector<1x8x1xf32>
    %108 = tpu.reciprocal %107 {approx = true} : vector<1x8x1xf32> -> vector<1x8x1xf32>
    %109 = vector.broadcast %108 : vector<1x8x1xf32> to vector<1x8x8xf32>
    %110 = arith.mulf %105, %109 : vector<1x8x8xf32>
    %111 = arith.truncf %110 : vector<1x8x8xf32> to vector<1x8x8xbf16>
    %112 = arith.truncf %93 : vector<1x8x8xf32> to vector<1x8x8xbf16>
    "tpu.trace_start"() <{level = 10 : i32, message = "bqk,bkd->bqd"}> : () -> ()
    %cst_38 = arith.constant dense<0.000000e+00> : vector<1x8x8xf32>
    %113 = tpu.matmul %111, %112, %cst_38 {dimension_numbers = #tpu.dot_dimension_numbers<[2], [1], [1], [2], [0, 0, 0, 1, 1, 2], [0], [0]>} : vector<1x8x8xbf16>, vector<1x8x8xbf16>, vector<1x8x8xf32> -> vector<1x8x8xf32>
    "tpu.trace_stop"() : () -> ()
    %114 = vector.extract_strided_slice %40 {offsets = [0, 0, 24], sizes = [1, 8, 8], strides = [1, 1, 1]} : vector<1x8x32xf32> to vector<1x8x8xf32>
    %115 = vector.extract_strided_slice %42 {offsets = [0, 0, 24], sizes = [1, 8, 8], strides = [1, 1, 1]} : vector<1x8x32xf32> to vector<1x8x8xf32>
    %116 = vector.extract_strided_slice %44 {offsets = [0, 0, 24], sizes = [1, 8, 8], strides = [1, 1, 1]} : vector<1x8x32xf32> to vector<1x8x8xf32>
    %117 = arith.truncf %114 : vector<1x8x8xf32> to vector<1x8x8xbf16>
    %118 = arith.truncf %115 : vector<1x8x8xf32> to vector<1x8x8xbf16>
    "tpu.trace_start"() <{level = 10 : i32, message = "bqd,bkd->bqk"}> : () -> ()
    %cst_39 = arith.constant dense<0.000000e+00> : vector<1x8x8xf32>
    %119 = tpu.matmul %117, %118, %cst_39 {dimension_numbers = #tpu.dot_dimension_numbers<[2], [2], [1], [1], [0, 0, 0, 1, 1, 1], [0], [0]>} : vector<1x8x8xbf16>, vector<1x8x8xbf16>, vector<1x8x8xf32> -> vector<1x8x8xf32>
    "tpu.trace_stop"() : () -> ()
    %cst_40 = arith.constant 0.353553385 : f32
    %120 = vector.broadcast %cst_40 : f32 to vector<1x8x8xf32>
    %121 = arith.mulf %119, %120 : vector<1x8x8xf32>
    %122 = vector.broadcast %28 : vector<1x1x8xf32> to vector<1x8x8xf32>
    %123 = arith.addf %121, %122 : vector<1x8x8xf32>
    %cst_41 = arith.constant dense<0xFF800000> : vector<1x8xf32>
    %124 = vector.multi_reduction <maximumf>, %123, %cst_41 [2] : vector<1x8x8xf32> to vector<1x8xf32>
    %125 = vector.shape_cast %124 : vector<1x8xf32> to vector<1x8x1xf32>
    %126 = vector.broadcast %125 : vector<1x8x1xf32> to vector<1x8x8xf32>
    %127 = arith.subf %123, %126 : vector<1x8x8xf32>
    %128 = math.exp %127 : vector<1x8x8xf32>
    %cst_42 = arith.constant dense<0.000000e+00> : vector<1x8xf32>
    %129 = vector.multi_reduction <add>, %128, %cst_42 [2] : vector<1x8x8xf32> to vector<1x8xf32>
    %130 = vector.shape_cast %129 : vector<1x8xf32> to vector<1x8x1xf32>
    %131 = tpu.reciprocal %130 {approx = true} : vector<1x8x1xf32> -> vector<1x8x1xf32>
    %132 = vector.broadcast %131 : vector<1x8x1xf32> to vector<1x8x8xf32>
    %133 = arith.mulf %128, %132 : vector<1x8x8xf32>
    %134 = arith.truncf %133 : vector<1x8x8xf32> to vector<1x8x8xbf16>
    %135 = arith.truncf %116 : vector<1x8x8xf32> to vector<1x8x8xbf16>
    "tpu.trace_start"() <{level = 10 : i32, message = "bqk,bkd->bqd"}> : () -> ()
    %cst_43 = arith.constant dense<0.000000e+00> : vector<1x8x8xf32>
    %136 = tpu.matmul %134, %135, %cst_43 {dimension_numbers = #tpu.dot_dimension_numbers<[2], [1], [1], [2], [0, 0, 0, 1, 1, 2], [0], [0]>} : vector<1x8x8xbf16>, vector<1x8x8xbf16>, vector<1x8x8xf32> -> vector<1x8x8xf32>
    "tpu.trace_stop"() : () -> ()
    %137 = tpu.concatenate %67, %90, %113, %136 in 2 : vector<1x8x8xf32>, vector<1x8x8xf32>, vector<1x8x8xf32>, vector<1x8x8xf32> -> vector<1x8x32xf32>
    %138 = vector.shape_cast %137 : vector<1x8x32xf32> to vector<8x32xf32>
    %c0_44 = arith.constant 0 : index
    %c0_45 = arith.constant 0 : index
    %c0_46 = arith.constant 0 : index
    %139 = vector.load %arg6[%c0_44, %c0_45, %c0_46] : memref<2x32x32xbf16, #tpu.memory_space<vmem>>, vector<1x32x32xbf16>
    %140 = vector.shape_cast %139 : vector<1x32x32xbf16> to vector<32x32xbf16>
    %141 = arith.truncf %138 : vector<8x32xf32> to vector<8x32xbf16>
    %cst_47 = arith.constant dense<0.000000e+00> : vector<8x32xf32>
    %142 = tpu.matmul %141, %140, %cst_47 {dimension_numbers = #tpu.dot_dimension_numbers<[1], [0], [0], [1], [0, 0, 1, 1], [], []>} : vector<8x32xbf16>, vector<32x32xbf16>, vector<8x32xf32> -> vector<8x32xf32>
    %143 = vector.extract_strided_slice %30 {offsets = [0, 0], sizes = [1, 32], strides = [1, 1]} : vector<6x32xf32> to vector<1x32xf32>
    %144 = vector.broadcast %143 : vector<1x32xf32> to vector<8x32xf32>
    %145 = arith.addf %142, %144 : vector<8x32xf32>
    %146 = arith.addf %145, %23 : vector<8x32xf32>
    %147 = vector.extract_strided_slice %30 {offsets = [1, 0], sizes = [1, 32], strides = [1, 1]} : vector<6x32xf32> to vector<1x32xf32>
    %148 = vector.extract_strided_slice %30 {offsets = [2, 0], sizes = [1, 32], strides = [1, 1]} : vector<6x32xf32> to vector<1x32xf32>
    %cst_48 = arith.constant dense<0.000000e+00> : vector<8xf32>
    %149 = vector.multi_reduction <add>, %146, %cst_48 [1] : vector<8x32xf32> to vector<8xf32>
    %150 = vector.shape_cast %149 : vector<8xf32> to vector<8x1xf32>
    %cst_49 = arith.constant 3.200000e+01 : f32
    %151 = vector.broadcast %cst_49 : f32 to vector<8x1xf32>
    %152 = arith.divf %150, %151 : vector<8x1xf32>
    %153 = vector.broadcast %152 : vector<8x1xf32> to vector<8x32xf32>
    %154 = arith.subf %146, %153 : vector<8x32xf32>
    %155 = arith.mulf %154, %154 : vector<8x32xf32>
    %cst_50 = arith.constant dense<0.000000e+00> : vector<8xf32>
    %156 = vector.multi_reduction <add>, %155, %cst_50 [1] : vector<8x32xf32> to vector<8xf32>
    %157 = vector.shape_cast %156 : vector<8xf32> to vector<8x1xf32>
    %cst_51 = arith.constant 3.200000e+01 : f32
    %158 = vector.broadcast %cst_51 : f32 to vector<8x1xf32>
    %159 = arith.divf %157, %158 : vector<8x1xf32>
    %cst_52 = arith.constant 9.99999974E-6 : f32
    %160 = vector.broadcast %cst_52 : f32 to vector<8x1xf32>
    %161 = arith.addf %159, %160 : vector<8x1xf32>
    %162 = math.rsqrt %161 : vector<8x1xf32>
    %163 = vector.broadcast %162 : vector<8x1xf32> to vector<8x32xf32>
    %164 = arith.mulf %154, %163 : vector<8x32xf32>
    %165 = vector.broadcast %147 : vector<1x32xf32> to vector<8x32xf32>
    %166 = arith.mulf %164, %165 : vector<8x32xf32>
    %167 = vector.broadcast %148 : vector<1x32xf32> to vector<8x32xf32>
    %168 = arith.addf %166, %167 : vector<8x32xf32>
    %c0_53 = arith.constant 0 : index
    %c0_54 = arith.constant 0 : index
    %c0_55 = arith.constant 0 : index
    %169 = vector.load %arg8[%c0_53, %c0_54, %c0_55] : memref<2x32x64xbf16, #tpu.memory_space<vmem>>, vector<1x32x64xbf16>
    %170 = vector.shape_cast %169 : vector<1x32x64xbf16> to vector<32x64xbf16>
    %171 = arith.truncf %168 : vector<8x32xf32> to vector<8x32xbf16>
    %cst_56 = arith.constant dense<0.000000e+00> : vector<8x64xf32>
    %172 = tpu.matmul %171, %170, %cst_56 {dimension_numbers = #tpu.dot_dimension_numbers<[1], [0], [0], [1], [0, 0, 1, 1], [], []>} : vector<8x32xbf16>, vector<32x64xbf16>, vector<8x64xf32> -> vector<8x64xf32>
    %c0_57 = arith.constant 0 : index
    %c0_58 = arith.constant 0 : index
    %c0_59 = arith.constant 0 : index
    %173 = vector.load %arg9[%c0_57, %c0_58, %c0_59] : memref<2x1x64xf32, #tpu.memory_space<vmem>>, vector<1x1x64xf32>
    %174 = vector.shape_cast %173 : vector<1x1x64xf32> to vector<1x64xf32>
    %175 = vector.broadcast %174 : vector<1x64xf32> to vector<8x64xf32>
    %176 = arith.addf %172, %175 : vector<8x64xf32>
    %cst_60 = arith.constant 5.000000e-01 : f32
    %177 = vector.broadcast %cst_60 : f32 to vector<8x64xf32>
    %178 = arith.mulf %177, %176 : vector<8x64xf32>
    %cst_61 = arith.constant 0.707106769 : f32
    %179 = vector.broadcast %cst_61 : f32 to vector<8x64xf32>
    %180 = arith.mulf %176, %179 : vector<8x64xf32>
    %181 = math.erf %180 : vector<8x64xf32>
    %cst_62 = arith.constant 1.000000e+00 : f32
    %182 = vector.broadcast %cst_62 : f32 to vector<8x64xf32>
    %183 = arith.addf %182, %181 : vector<8x64xf32>
    %184 = arith.mulf %178, %183 : vector<8x64xf32>
    %c0_63 = arith.constant 0 : index
    %c0_64 = arith.constant 0 : index
    %c0_65 = arith.constant 0 : index
    %185 = vector.load %arg10[%c0_63, %c0_64, %c0_65] : memref<2x64x32xbf16, #tpu.memory_space<vmem>>, vector<1x64x32xbf16>
    %186 = vector.shape_cast %185 : vector<1x64x32xbf16> to vector<64x32xbf16>
    %187 = arith.truncf %184 : vector<8x64xf32> to vector<8x64xbf16>
    %cst_66 = arith.constant dense<0.000000e+00> : vector<8x32xf32>
    %188 = tpu.matmul %187, %186, %cst_66 {dimension_numbers = #tpu.dot_dimension_numbers<[1], [0], [0], [1], [0, 0, 1, 1], [], []>} : vector<8x64xbf16>, vector<64x32xbf16>, vector<8x32xf32> -> vector<8x32xf32>
    %189 = vector.extract_strided_slice %30 {offsets = [3, 0], sizes = [1, 32], strides = [1, 1]} : vector<6x32xf32> to vector<1x32xf32>
    %190 = vector.broadcast %189 : vector<1x32xf32> to vector<8x32xf32>
    %191 = arith.addf %188, %190 : vector<8x32xf32>
    %192 = arith.addf %191, %168 : vector<8x32xf32>
    %193 = vector.extract_strided_slice %30 {offsets = [4, 0], sizes = [1, 32], strides = [1, 1]} : vector<6x32xf32> to vector<1x32xf32>
    %194 = vector.extract_strided_slice %30 {offsets = [5, 0], sizes = [1, 32], strides = [1, 1]} : vector<6x32xf32> to vector<1x32xf32>
    %cst_67 = arith.constant dense<0.000000e+00> : vector<8xf32>
    %195 = vector.multi_reduction <add>, %192, %cst_67 [1] : vector<8x32xf32> to vector<8xf32>
    %196 = vector.shape_cast %195 : vector<8xf32> to vector<8x1xf32>
    %cst_68 = arith.constant 3.200000e+01 : f32
    %197 = vector.broadcast %cst_68 : f32 to vector<8x1xf32>
    %198 = arith.divf %196, %197 : vector<8x1xf32>
    %199 = vector.broadcast %198 : vector<8x1xf32> to vector<8x32xf32>
    %200 = arith.subf %192, %199 : vector<8x32xf32>
    %201 = arith.mulf %200, %200 : vector<8x32xf32>
    %cst_69 = arith.constant dense<0.000000e+00> : vector<8xf32>
    %202 = vector.multi_reduction <add>, %201, %cst_69 [1] : vector<8x32xf32> to vector<8xf32>
    %203 = vector.shape_cast %202 : vector<8xf32> to vector<8x1xf32>
    %cst_70 = arith.constant 3.200000e+01 : f32
    %204 = vector.broadcast %cst_70 : f32 to vector<8x1xf32>
    %205 = arith.divf %203, %204 : vector<8x1xf32>
    %cst_71 = arith.constant 9.99999974E-6 : f32
    %206 = vector.broadcast %cst_71 : f32 to vector<8x1xf32>
    %207 = arith.addf %205, %206 : vector<8x1xf32>
    %208 = math.rsqrt %207 : vector<8x1xf32>
    %209 = vector.broadcast %208 : vector<8x1xf32> to vector<8x32xf32>
    %210 = arith.mulf %200, %209 : vector<8x32xf32>
    %211 = vector.broadcast %193 : vector<1x32xf32> to vector<8x32xf32>
    %212 = arith.mulf %210, %211 : vector<8x32xf32>
    %213 = vector.broadcast %194 : vector<1x32xf32> to vector<8x32xf32>
    %214 = arith.addf %212, %213 : vector<8x32xf32>
    %c1_72 = arith.constant 1 : index
    %c0_73 = arith.constant 0 : index
    %c0_74 = arith.constant 0 : index
    %215 = vector.load %arg7[%c1_72, %c0_73, %c0_74] : memref<2x6x32xf32, #tpu.memory_space<vmem>>, vector<1x6x32xf32>
    %216 = vector.shape_cast %215 : vector<1x6x32xf32> to vector<6x32xf32>
    %c1_75 = arith.constant 1 : index
    %c0_76 = arith.constant 0 : index
    %c0_77 = arith.constant 0 : index
    %217 = vector.load %arg4[%c1_75, %c0_76, %c0_77] : memref<2x32x96xbf16, #tpu.memory_space<vmem>>, vector<1x32x96xbf16>
    %218 = vector.shape_cast %217 : vector<1x32x96xbf16> to vector<32x96xbf16>
    %219 = arith.truncf %214 : vector<8x32xf32> to vector<8x32xbf16>
    %cst_78 = arith.constant dense<0.000000e+00> : vector<8x96xf32>
    %220 = tpu.matmul %219, %218, %cst_78 {dimension_numbers = #tpu.dot_dimension_numbers<[1], [0], [0], [1], [0, 0, 1, 1], [], []>} : vector<8x32xbf16>, vector<32x96xbf16>, vector<8x96xf32> -> vector<8x96xf32>
    %c1_79 = arith.constant 1 : index
    %c0_80 = arith.constant 0 : index
    %c0_81 = arith.constant 0 : index
    %221 = vector.load %arg5[%c1_79, %c0_80, %c0_81] : memref<2x1x96xf32, #tpu.memory_space<vmem>>, vector<1x1x96xf32>
    %222 = vector.shape_cast %221 : vector<1x1x96xf32> to vector<1x96xf32>
    %223 = vector.broadcast %222 : vector<1x96xf32> to vector<8x96xf32>
    %224 = arith.addf %220, %223 : vector<8x96xf32>
    %225 = vector.extract_strided_slice %224 {offsets = [0, 0], sizes = [8, 32], strides = [1, 1]} : vector<8x96xf32> to vector<8x32xf32>
    %226 = vector.shape_cast %225 : vector<8x32xf32> to vector<1x8x32xf32>
    %227 = vector.extract_strided_slice %224 {offsets = [0, 32], sizes = [8, 32], strides = [1, 1]} : vector<8x96xf32> to vector<8x32xf32>
    %228 = vector.shape_cast %227 : vector<8x32xf32> to vector<1x8x32xf32>
    %229 = vector.extract_strided_slice %224 {offsets = [0, 64], sizes = [8, 32], strides = [1, 1]} : vector<8x96xf32> to vector<8x32xf32>
    %230 = vector.shape_cast %229 : vector<8x32xf32> to vector<1x8x32xf32>
    %231 = vector.extract_strided_slice %226 {offsets = [0, 0, 0], sizes = [1, 8, 8], strides = [1, 1, 1]} : vector<1x8x32xf32> to vector<1x8x8xf32>
    %232 = vector.extract_strided_slice %228 {offsets = [0, 0, 0], sizes = [1, 8, 8], strides = [1, 1, 1]} : vector<1x8x32xf32> to vector<1x8x8xf32>
    %233 = vector.extract_strided_slice %230 {offsets = [0, 0, 0], sizes = [1, 8, 8], strides = [1, 1, 1]} : vector<1x8x32xf32> to vector<1x8x8xf32>
    %234 = arith.truncf %231 : vector<1x8x8xf32> to vector<1x8x8xbf16>
    %235 = arith.truncf %232 : vector<1x8x8xf32> to vector<1x8x8xbf16>
    "tpu.trace_start"() <{level = 10 : i32, message = "bqd,bkd->bqk"}> : () -> ()
    %cst_82 = arith.constant dense<0.000000e+00> : vector<1x8x8xf32>
    %236 = tpu.matmul %234, %235, %cst_82 {dimension_numbers = #tpu.dot_dimension_numbers<[2], [2], [1], [1], [0, 0, 0, 1, 1, 1], [0], [0]>} : vector<1x8x8xbf16>, vector<1x8x8xbf16>, vector<1x8x8xf32> -> vector<1x8x8xf32>
    "tpu.trace_stop"() : () -> ()
    %cst_83 = arith.constant 0.353553385 : f32
    %237 = vector.broadcast %cst_83 : f32 to vector<1x8x8xf32>
    %238 = arith.mulf %236, %237 : vector<1x8x8xf32>
    %239 = vector.broadcast %28 : vector<1x1x8xf32> to vector<1x8x8xf32>
    %240 = arith.addf %238, %239 : vector<1x8x8xf32>
    %cst_84 = arith.constant dense<0xFF800000> : vector<1x8xf32>
    %241 = vector.multi_reduction <maximumf>, %240, %cst_84 [2] : vector<1x8x8xf32> to vector<1x8xf32>
    %242 = vector.shape_cast %241 : vector<1x8xf32> to vector<1x8x1xf32>
    %243 = vector.broadcast %242 : vector<1x8x1xf32> to vector<1x8x8xf32>
    %244 = arith.subf %240, %243 : vector<1x8x8xf32>
    %245 = math.exp %244 : vector<1x8x8xf32>
    %cst_85 = arith.constant dense<0.000000e+00> : vector<1x8xf32>
    %246 = vector.multi_reduction <add>, %245, %cst_85 [2] : vector<1x8x8xf32> to vector<1x8xf32>
    %247 = vector.shape_cast %246 : vector<1x8xf32> to vector<1x8x1xf32>
    %248 = tpu.reciprocal %247 {approx = true} : vector<1x8x1xf32> -> vector<1x8x1xf32>
    %249 = vector.broadcast %248 : vector<1x8x1xf32> to vector<1x8x8xf32>
    %250 = arith.mulf %245, %249 : vector<1x8x8xf32>
    %251 = arith.truncf %250 : vector<1x8x8xf32> to vector<1x8x8xbf16>
    %252 = arith.truncf %233 : vector<1x8x8xf32> to vector<1x8x8xbf16>
    "tpu.trace_start"() <{level = 10 : i32, message = "bqk,bkd->bqd"}> : () -> ()
    %cst_86 = arith.constant dense<0.000000e+00> : vector<1x8x8xf32>
    %253 = tpu.matmul %251, %252, %cst_86 {dimension_numbers = #tpu.dot_dimension_numbers<[2], [1], [1], [2], [0, 0, 0, 1, 1, 2], [0], [0]>} : vector<1x8x8xbf16>, vector<1x8x8xbf16>, vector<1x8x8xf32> -> vector<1x8x8xf32>
    "tpu.trace_stop"() : () -> ()
    %254 = vector.extract_strided_slice %226 {offsets = [0, 0, 8], sizes = [1, 8, 8], strides = [1, 1, 1]} : vector<1x8x32xf32> to vector<1x8x8xf32>
    %255 = vector.extract_strided_slice %228 {offsets = [0, 0, 8], sizes = [1, 8, 8], strides = [1, 1, 1]} : vector<1x8x32xf32> to vector<1x8x8xf32>
    %256 = vector.extract_strided_slice %230 {offsets = [0, 0, 8], sizes = [1, 8, 8], strides = [1, 1, 1]} : vector<1x8x32xf32> to vector<1x8x8xf32>
    %257 = arith.truncf %254 : vector<1x8x8xf32> to vector<1x8x8xbf16>
    %258 = arith.truncf %255 : vector<1x8x8xf32> to vector<1x8x8xbf16>
    "tpu.trace_start"() <{level = 10 : i32, message = "bqd,bkd->bqk"}> : () -> ()
    %cst_87 = arith.constant dense<0.000000e+00> : vector<1x8x8xf32>
    %259 = tpu.matmul %257, %258, %cst_87 {dimension_numbers = #tpu.dot_dimension_numbers<[2], [2], [1], [1], [0, 0, 0, 1, 1, 1], [0], [0]>} : vector<1x8x8xbf16>, vector<1x8x8xbf16>, vector<1x8x8xf32> -> vector<1x8x8xf32>
    "tpu.trace_stop"() : () -> ()
    %cst_88 = arith.constant 0.353553385 : f32
    %260 = vector.broadcast %cst_88 : f32 to vector<1x8x8xf32>
    %261 = arith.mulf %259, %260 : vector<1x8x8xf32>
    %262 = vector.broadcast %28 : vector<1x1x8xf32> to vector<1x8x8xf32>
    %263 = arith.addf %261, %262 : vector<1x8x8xf32>
    %cst_89 = arith.constant dense<0xFF800000> : vector<1x8xf32>
    %264 = vector.multi_reduction <maximumf>, %263, %cst_89 [2] : vector<1x8x8xf32> to vector<1x8xf32>
    %265 = vector.shape_cast %264 : vector<1x8xf32> to vector<1x8x1xf32>
    %266 = vector.broadcast %265 : vector<1x8x1xf32> to vector<1x8x8xf32>
    %267 = arith.subf %263, %266 : vector<1x8x8xf32>
    %268 = math.exp %267 : vector<1x8x8xf32>
    %cst_90 = arith.constant dense<0.000000e+00> : vector<1x8xf32>
    %269 = vector.multi_reduction <add>, %268, %cst_90 [2] : vector<1x8x8xf32> to vector<1x8xf32>
    %270 = vector.shape_cast %269 : vector<1x8xf32> to vector<1x8x1xf32>
    %271 = tpu.reciprocal %270 {approx = true} : vector<1x8x1xf32> -> vector<1x8x1xf32>
    %272 = vector.broadcast %271 : vector<1x8x1xf32> to vector<1x8x8xf32>
    %273 = arith.mulf %268, %272 : vector<1x8x8xf32>
    %274 = arith.truncf %273 : vector<1x8x8xf32> to vector<1x8x8xbf16>
    %275 = arith.truncf %256 : vector<1x8x8xf32> to vector<1x8x8xbf16>
    "tpu.trace_start"() <{level = 10 : i32, message = "bqk,bkd->bqd"}> : () -> ()
    %cst_91 = arith.constant dense<0.000000e+00> : vector<1x8x8xf32>
    %276 = tpu.matmul %274, %275, %cst_91 {dimension_numbers = #tpu.dot_dimension_numbers<[2], [1], [1], [2], [0, 0, 0, 1, 1, 2], [0], [0]>} : vector<1x8x8xbf16>, vector<1x8x8xbf16>, vector<1x8x8xf32> -> vector<1x8x8xf32>
    "tpu.trace_stop"() : () -> ()
    %277 = vector.extract_strided_slice %226 {offsets = [0, 0, 16], sizes = [1, 8, 8], strides = [1, 1, 1]} : vector<1x8x32xf32> to vector<1x8x8xf32>
    %278 = vector.extract_strided_slice %228 {offsets = [0, 0, 16], sizes = [1, 8, 8], strides = [1, 1, 1]} : vector<1x8x32xf32> to vector<1x8x8xf32>
    %279 = vector.extract_strided_slice %230 {offsets = [0, 0, 16], sizes = [1, 8, 8], strides = [1, 1, 1]} : vector<1x8x32xf32> to vector<1x8x8xf32>
    %280 = arith.truncf %277 : vector<1x8x8xf32> to vector<1x8x8xbf16>
    %281 = arith.truncf %278 : vector<1x8x8xf32> to vector<1x8x8xbf16>
    "tpu.trace_start"() <{level = 10 : i32, message = "bqd,bkd->bqk"}> : () -> ()
    %cst_92 = arith.constant dense<0.000000e+00> : vector<1x8x8xf32>
    %282 = tpu.matmul %280, %281, %cst_92 {dimension_numbers = #tpu.dot_dimension_numbers<[2], [2], [1], [1], [0, 0, 0, 1, 1, 1], [0], [0]>} : vector<1x8x8xbf16>, vector<1x8x8xbf16>, vector<1x8x8xf32> -> vector<1x8x8xf32>
    "tpu.trace_stop"() : () -> ()
    %cst_93 = arith.constant 0.353553385 : f32
    %283 = vector.broadcast %cst_93 : f32 to vector<1x8x8xf32>
    %284 = arith.mulf %282, %283 : vector<1x8x8xf32>
    %285 = vector.broadcast %28 : vector<1x1x8xf32> to vector<1x8x8xf32>
    %286 = arith.addf %284, %285 : vector<1x8x8xf32>
    %cst_94 = arith.constant dense<0xFF800000> : vector<1x8xf32>
    %287 = vector.multi_reduction <maximumf>, %286, %cst_94 [2] : vector<1x8x8xf32> to vector<1x8xf32>
    %288 = vector.shape_cast %287 : vector<1x8xf32> to vector<1x8x1xf32>
    %289 = vector.broadcast %288 : vector<1x8x1xf32> to vector<1x8x8xf32>
    %290 = arith.subf %286, %289 : vector<1x8x8xf32>
    %291 = math.exp %290 : vector<1x8x8xf32>
    %cst_95 = arith.constant dense<0.000000e+00> : vector<1x8xf32>
    %292 = vector.multi_reduction <add>, %291, %cst_95 [2] : vector<1x8x8xf32> to vector<1x8xf32>
    %293 = vector.shape_cast %292 : vector<1x8xf32> to vector<1x8x1xf32>
    %294 = tpu.reciprocal %293 {approx = true} : vector<1x8x1xf32> -> vector<1x8x1xf32>
    %295 = vector.broadcast %294 : vector<1x8x1xf32> to vector<1x8x8xf32>
    %296 = arith.mulf %291, %295 : vector<1x8x8xf32>
    %297 = arith.truncf %296 : vector<1x8x8xf32> to vector<1x8x8xbf16>
    %298 = arith.truncf %279 : vector<1x8x8xf32> to vector<1x8x8xbf16>
    "tpu.trace_start"() <{level = 10 : i32, message = "bqk,bkd->bqd"}> : () -> ()
    %cst_96 = arith.constant dense<0.000000e+00> : vector<1x8x8xf32>
    %299 = tpu.matmul %297, %298, %cst_96 {dimension_numbers = #tpu.dot_dimension_numbers<[2], [1], [1], [2], [0, 0, 0, 1, 1, 2], [0], [0]>} : vector<1x8x8xbf16>, vector<1x8x8xbf16>, vector<1x8x8xf32> -> vector<1x8x8xf32>
    "tpu.trace_stop"() : () -> ()
    %300 = vector.extract_strided_slice %226 {offsets = [0, 0, 24], sizes = [1, 8, 8], strides = [1, 1, 1]} : vector<1x8x32xf32> to vector<1x8x8xf32>
    %301 = vector.extract_strided_slice %228 {offsets = [0, 0, 24], sizes = [1, 8, 8], strides = [1, 1, 1]} : vector<1x8x32xf32> to vector<1x8x8xf32>
    %302 = vector.extract_strided_slice %230 {offsets = [0, 0, 24], sizes = [1, 8, 8], strides = [1, 1, 1]} : vector<1x8x32xf32> to vector<1x8x8xf32>
    %303 = arith.truncf %300 : vector<1x8x8xf32> to vector<1x8x8xbf16>
    %304 = arith.truncf %301 : vector<1x8x8xf32> to vector<1x8x8xbf16>
    "tpu.trace_start"() <{level = 10 : i32, message = "bqd,bkd->bqk"}> : () -> ()
    %cst_97 = arith.constant dense<0.000000e+00> : vector<1x8x8xf32>
    %305 = tpu.matmul %303, %304, %cst_97 {dimension_numbers = #tpu.dot_dimension_numbers<[2], [2], [1], [1], [0, 0, 0, 1, 1, 1], [0], [0]>} : vector<1x8x8xbf16>, vector<1x8x8xbf16>, vector<1x8x8xf32> -> vector<1x8x8xf32>
    "tpu.trace_stop"() : () -> ()
    %cst_98 = arith.constant 0.353553385 : f32
    %306 = vector.broadcast %cst_98 : f32 to vector<1x8x8xf32>
    %307 = arith.mulf %305, %306 : vector<1x8x8xf32>
    %308 = vector.broadcast %28 : vector<1x1x8xf32> to vector<1x8x8xf32>
    %309 = arith.addf %307, %308 : vector<1x8x8xf32>
    %cst_99 = arith.constant dense<0xFF800000> : vector<1x8xf32>
    %310 = vector.multi_reduction <maximumf>, %309, %cst_99 [2] : vector<1x8x8xf32> to vector<1x8xf32>
    %311 = vector.shape_cast %310 : vector<1x8xf32> to vector<1x8x1xf32>
    %312 = vector.broadcast %311 : vector<1x8x1xf32> to vector<1x8x8xf32>
    %313 = arith.subf %309, %312 : vector<1x8x8xf32>
    %314 = math.exp %313 : vector<1x8x8xf32>
    %cst_100 = arith.constant dense<0.000000e+00> : vector<1x8xf32>
    %315 = vector.multi_reduction <add>, %314, %cst_100 [2] : vector<1x8x8xf32> to vector<1x8xf32>
    %316 = vector.shape_cast %315 : vector<1x8xf32> to vector<1x8x1xf32>
    %317 = tpu.reciprocal %316 {approx = true} : vector<1x8x1xf32> -> vector<1x8x1xf32>
    %318 = vector.broadcast %317 : vector<1x8x1xf32> to vector<1x8x8xf32>
    %319 = arith.mulf %314, %318 : vector<1x8x8xf32>
    %320 = arith.truncf %319 : vector<1x8x8xf32> to vector<1x8x8xbf16>
    %321 = arith.truncf %302 : vector<1x8x8xf32> to vector<1x8x8xbf16>
    "tpu.trace_start"() <{level = 10 : i32, message = "bqk,bkd->bqd"}> : () -> ()
    %cst_101 = arith.constant dense<0.000000e+00> : vector<1x8x8xf32>
    %322 = tpu.matmul %320, %321, %cst_101 {dimension_numbers = #tpu.dot_dimension_numbers<[2], [1], [1], [2], [0, 0, 0, 1, 1, 2], [0], [0]>} : vector<1x8x8xbf16>, vector<1x8x8xbf16>, vector<1x8x8xf32> -> vector<1x8x8xf32>
    "tpu.trace_stop"() : () -> ()
    %323 = tpu.concatenate %253, %276, %299, %322 in 2 : vector<1x8x8xf32>, vector<1x8x8xf32>, vector<1x8x8xf32>, vector<1x8x8xf32> -> vector<1x8x32xf32>
    %324 = vector.shape_cast %323 : vector<1x8x32xf32> to vector<8x32xf32>
    %c1_102 = arith.constant 1 : index
    %c0_103 = arith.constant 0 : index
    %c0_104 = arith.constant 0 : index
    %325 = vector.load %arg6[%c1_102, %c0_103, %c0_104] : memref<2x32x32xbf16, #tpu.memory_space<vmem>>, vector<1x32x32xbf16>
    %326 = vector.shape_cast %325 : vector<1x32x32xbf16> to vector<32x32xbf16>
    %327 = arith.truncf %324 : vector<8x32xf32> to vector<8x32xbf16>
    %cst_105 = arith.constant dense<0.000000e+00> : vector<8x32xf32>
    %328 = tpu.matmul %327, %326, %cst_105 {dimension_numbers = #tpu.dot_dimension_numbers<[1], [0], [0], [1], [0, 0, 1, 1], [], []>} : vector<8x32xbf16>, vector<32x32xbf16>, vector<8x32xf32> -> vector<8x32xf32>
    %329 = vector.extract_strided_slice %216 {offsets = [0, 0], sizes = [1, 32], strides = [1, 1]} : vector<6x32xf32> to vector<1x32xf32>
    %330 = vector.broadcast %329 : vector<1x32xf32> to vector<8x32xf32>
    %331 = arith.addf %328, %330 : vector<8x32xf32>
    %332 = arith.addf %331, %214 : vector<8x32xf32>
    %333 = vector.extract_strided_slice %216 {offsets = [1, 0], sizes = [1, 32], strides = [1, 1]} : vector<6x32xf32> to vector<1x32xf32>
    %334 = vector.extract_strided_slice %216 {offsets = [2, 0], sizes = [1, 32], strides = [1, 1]} : vector<6x32xf32> to vector<1x32xf32>
    %cst_106 = arith.constant dense<0.000000e+00> : vector<8xf32>
    %335 = vector.multi_reduction <add>, %332, %cst_106 [1] : vector<8x32xf32> to vector<8xf32>
    %336 = vector.shape_cast %335 : vector<8xf32> to vector<8x1xf32>
    %cst_107 = arith.constant 3.200000e+01 : f32
    %337 = vector.broadcast %cst_107 : f32 to vector<8x1xf32>
    %338 = arith.divf %336, %337 : vector<8x1xf32>
    %339 = vector.broadcast %338 : vector<8x1xf32> to vector<8x32xf32>
    %340 = arith.subf %332, %339 : vector<8x32xf32>
    %341 = arith.mulf %340, %340 : vector<8x32xf32>
    %cst_108 = arith.constant dense<0.000000e+00> : vector<8xf32>
    %342 = vector.multi_reduction <add>, %341, %cst_108 [1] : vector<8x32xf32> to vector<8xf32>
    %343 = vector.shape_cast %342 : vector<8xf32> to vector<8x1xf32>
    %cst_109 = arith.constant 3.200000e+01 : f32
    %344 = vector.broadcast %cst_109 : f32 to vector<8x1xf32>
    %345 = arith.divf %343, %344 : vector<8x1xf32>
    %cst_110 = arith.constant 9.99999974E-6 : f32
    %346 = vector.broadcast %cst_110 : f32 to vector<8x1xf32>
    %347 = arith.addf %345, %346 : vector<8x1xf32>
    %348 = math.rsqrt %347 : vector<8x1xf32>
    %349 = vector.broadcast %348 : vector<8x1xf32> to vector<8x32xf32>
    %350 = arith.mulf %340, %349 : vector<8x32xf32>
    %351 = vector.broadcast %333 : vector<1x32xf32> to vector<8x32xf32>
    %352 = arith.mulf %350, %351 : vector<8x32xf32>
    %353 = vector.broadcast %334 : vector<1x32xf32> to vector<8x32xf32>
    %354 = arith.addf %352, %353 : vector<8x32xf32>
    %c1_111 = arith.constant 1 : index
    %c0_112 = arith.constant 0 : index
    %c0_113 = arith.constant 0 : index
    %355 = vector.load %arg8[%c1_111, %c0_112, %c0_113] : memref<2x32x64xbf16, #tpu.memory_space<vmem>>, vector<1x32x64xbf16>
    %356 = vector.shape_cast %355 : vector<1x32x64xbf16> to vector<32x64xbf16>
    %357 = arith.truncf %354 : vector<8x32xf32> to vector<8x32xbf16>
    %cst_114 = arith.constant dense<0.000000e+00> : vector<8x64xf32>
    %358 = tpu.matmul %357, %356, %cst_114 {dimension_numbers = #tpu.dot_dimension_numbers<[1], [0], [0], [1], [0, 0, 1, 1], [], []>} : vector<8x32xbf16>, vector<32x64xbf16>, vector<8x64xf32> -> vector<8x64xf32>
    %c1_115 = arith.constant 1 : index
    %c0_116 = arith.constant 0 : index
    %c0_117 = arith.constant 0 : index
    %359 = vector.load %arg9[%c1_115, %c0_116, %c0_117] : memref<2x1x64xf32, #tpu.memory_space<vmem>>, vector<1x1x64xf32>
    %360 = vector.shape_cast %359 : vector<1x1x64xf32> to vector<1x64xf32>
    %361 = vector.broadcast %360 : vector<1x64xf32> to vector<8x64xf32>
    %362 = arith.addf %358, %361 : vector<8x64xf32>
    %cst_118 = arith.constant 5.000000e-01 : f32
    %363 = vector.broadcast %cst_118 : f32 to vector<8x64xf32>
    %364 = arith.mulf %363, %362 : vector<8x64xf32>
    %cst_119 = arith.constant 0.707106769 : f32
    %365 = vector.broadcast %cst_119 : f32 to vector<8x64xf32>
    %366 = arith.mulf %362, %365 : vector<8x64xf32>
    %367 = math.erf %366 : vector<8x64xf32>
    %cst_120 = arith.constant 1.000000e+00 : f32
    %368 = vector.broadcast %cst_120 : f32 to vector<8x64xf32>
    %369 = arith.addf %368, %367 : vector<8x64xf32>
    %370 = arith.mulf %364, %369 : vector<8x64xf32>
    %c1_121 = arith.constant 1 : index
    %c0_122 = arith.constant 0 : index
    %c0_123 = arith.constant 0 : index
    %371 = vector.load %arg10[%c1_121, %c0_122, %c0_123] : memref<2x64x32xbf16, #tpu.memory_space<vmem>>, vector<1x64x32xbf16>
    %372 = vector.shape_cast %371 : vector<1x64x32xbf16> to vector<64x32xbf16>
    %373 = arith.truncf %370 : vector<8x64xf32> to vector<8x64xbf16>
    %cst_124 = arith.constant dense<0.000000e+00> : vector<8x32xf32>
    %374 = tpu.matmul %373, %372, %cst_124 {dimension_numbers = #tpu.dot_dimension_numbers<[1], [0], [0], [1], [0, 0, 1, 1], [], []>} : vector<8x64xbf16>, vector<64x32xbf16>, vector<8x32xf32> -> vector<8x32xf32>
    %375 = vector.extract_strided_slice %216 {offsets = [3, 0], sizes = [1, 32], strides = [1, 1]} : vector<6x32xf32> to vector<1x32xf32>
    %376 = vector.broadcast %375 : vector<1x32xf32> to vector<8x32xf32>
    %377 = arith.addf %374, %376 : vector<8x32xf32>
    %378 = arith.addf %377, %354 : vector<8x32xf32>
    %379 = vector.extract_strided_slice %216 {offsets = [4, 0], sizes = [1, 32], strides = [1, 1]} : vector<6x32xf32> to vector<1x32xf32>
    %380 = vector.extract_strided_slice %216 {offsets = [5, 0], sizes = [1, 32], strides = [1, 1]} : vector<6x32xf32> to vector<1x32xf32>
    %cst_125 = arith.constant dense<0.000000e+00> : vector<8xf32>
    %381 = vector.multi_reduction <add>, %378, %cst_125 [1] : vector<8x32xf32> to vector<8xf32>
    %382 = vector.shape_cast %381 : vector<8xf32> to vector<8x1xf32>
    %cst_126 = arith.constant 3.200000e+01 : f32
    %383 = vector.broadcast %cst_126 : f32 to vector<8x1xf32>
    %384 = arith.divf %382, %383 : vector<8x1xf32>
    %385 = vector.broadcast %384 : vector<8x1xf32> to vector<8x32xf32>
    %386 = arith.subf %378, %385 : vector<8x32xf32>
    %387 = arith.mulf %386, %386 : vector<8x32xf32>
    %cst_127 = arith.constant dense<0.000000e+00> : vector<8xf32>
    %388 = vector.multi_reduction <add>, %387, %cst_127 [1] : vector<8x32xf32> to vector<8xf32>
    %389 = vector.shape_cast %388 : vector<8xf32> to vector<8x1xf32>
    %cst_128 = arith.constant 3.200000e+01 : f32
    %390 = vector.broadcast %cst_128 : f32 to vector<8x1xf32>
    %391 = arith.divf %389, %390 : vector<8x1xf32>
    %cst_129 = arith.constant 9.99999974E-6 : f32
    %392 = vector.broadcast %cst_129 : f32 to vector<8x1xf32>
    %393 = arith.addf %391, %392 : vector<8x1xf32>
    %394 = math.rsqrt %393 : vector<8x1xf32>
    %395 = vector.broadcast %394 : vector<8x1xf32> to vector<8x32xf32>
    %396 = arith.mulf %386, %395 : vector<8x32xf32>
    %397 = vector.broadcast %379 : vector<1x32xf32> to vector<8x32xf32>
    %398 = arith.mulf %396, %397 : vector<8x32xf32>
    %399 = vector.broadcast %380 : vector<1x32xf32> to vector<8x32xf32>
    %400 = arith.addf %398, %399 : vector<8x32xf32>
    %401 = vector.shape_cast %400 : vector<8x32xf32> to vector<1x8x32xf32>
    %402 = vector.extract_strided_slice %401 {offsets = [0, 0, 0], sizes = [1, 1, 32], strides = [1, 1, 1]} : vector<1x8x32xf32> to vector<1x1x32xf32>
    %403 = vector.shape_cast %402 : vector<1x1x32xf32> to vector<1x32xf32>
    %c0_130 = arith.constant 0 : index
    %c0_131 = arith.constant 0 : index
    %404 = vector.load %arg11[%c0_130, %c0_131] : memref<32x32xbf16, #tpu.memory_space<vmem>>, vector<32x32xbf16>
    %405 = arith.truncf %403 : vector<1x32xf32> to vector<1x32xbf16>
    %cst_132 = arith.constant dense<0.000000e+00> : vector<1x32xf32>
    %406 = tpu.matmul %405, %404, %cst_132 {dimension_numbers = #tpu.dot_dimension_numbers<[1], [0], [0], [1], [0, 0, 1, 1], [], []>} : vector<1x32xbf16>, vector<32x32xbf16>, vector<1x32xf32> -> vector<1x32xf32>
    %c0_133 = arith.constant 0 : index
    %c0_134 = arith.constant 0 : index
    %407 = vector.load %arg12[%c0_133, %c0_134] : memref<1x32xf32, #tpu.memory_space<vmem>>, vector<1x32xf32>
    %408 = arith.addf %406, %407 : vector<1x32xf32>
    %409 = math.tanh %408 : vector<1x32xf32>
    %c0_135 = arith.constant 0 : index
    %c0_136 = arith.constant 0 : index
    %410 = vector.load %arg13[%c0_135, %c0_136] : memref<32x2xbf16, #tpu.memory_space<vmem>>, vector<32x2xbf16>
    %411 = arith.truncf %409 : vector<1x32xf32> to vector<1x32xbf16>
    %cst_137 = arith.constant dense<0.000000e+00> : vector<1x2xf32>
    %412 = tpu.matmul %411, %410, %cst_137 {dimension_numbers = #tpu.dot_dimension_numbers<[1], [0], [0], [1], [0, 0, 1, 1], [], []>} : vector<1x32xbf16>, vector<32x2xbf16>, vector<1x2xf32> -> vector<1x2xf32>
    %c0_138 = arith.constant 0 : index
    %c0_139 = arith.constant 0 : index
    %413 = vector.load %arg14[%c0_138, %c0_139] : memref<1x2xf32, #tpu.memory_space<vmem>>, vector<1x2xf32>
    %414 = arith.addf %412, %413 : vector<1x2xf32>
    %c0_140 = arith.constant 0 : index
    %c0_141 = arith.constant 0 : index
    %c0_142 = arith.constant 0 : index
    %415 = vector.load %arg15[%c0_140, %c0_141, %c0_142] : memref<1x1x2xf32, #tpu.memory_space<vmem>>, vector<1x1x2xf32>
    %416 = vector.shape_cast %415 : vector<1x1x2xf32> to vector<1x2xf32>
    %417 = vector.shape_cast %414 : vector<1x2xf32> to vector<1x1x2xf32>
    tpu.vector_store %arg15[%c0_140, %c0_141, %c0_142], %417 {strides = array<i32>} : memref<1x1x2xf32, #tpu.memory_space<vmem>>, vector<1x1x2xf32>,
    return
  }
  func.func @transform_0(%arg0: i32) -> (i32, i32, i32) {
    %c0_i32 = arith.constant 0 : i32
    %c0_i32_0 = arith.constant 0 : i32
    %c0_i32_1 = arith.constant 0 : i32
    return %arg0, %c0_i32, %c0_i32_0 : i32, i32, i32
  }
  func.func @transform_1(%arg0: i32) -> (i32, i32, i32) {
    %c0_i32 = arith.constant 0 : i32
    %c0_i32_0 = arith.constant 0 : i32
    %c0_i32_1 = arith.constant 0 : i32
    return %arg0, %c0_i32, %c0_i32_0 : i32, i32, i32
  }
  func.func @transform_2(%arg0: i32) -> (i32, i32) {
    %c0_i32 = arith.constant 0 : i32
    %c0_i32_0 = arith.constant 0 : i32
    %c0_i32_1 = arith.constant 0 : i32
    return %c0_i32, %c0_i32_0 : i32, i32
  }
  func.func @transform_3(%arg0: i32) -> (i32, i32, i32) {
    %c0_i32 = arith.constant 0 : i32
    %c0_i32_0 = arith.constant 0 : i32
    %c0_i32_1 = arith.constant 0 : i32
    %c0_i32_2 = arith.constant 0 : i32
    return %c0_i32, %c0_i32_0, %c0_i32_1 : i32, i32, i32
  }
  func.func @transform_4(%arg0: i32) -> (i32, i32, i32) {
    %c0_i32 = arith.constant 0 : i32
    %c0_i32_0 = arith.constant 0 : i32
    %c0_i32_1 = arith.constant 0 : i32
    %c0_i32_2 = arith.constant 0 : i32
    return %c0_i32, %c0_i32_0, %c0_i32_1 : i32, i32, i32
  }
  func.func @transform_5(%arg0: i32) -> (i32, i32, i32) {
    %c0_i32 = arith.constant 0 : i32
    %c0_i32_0 = arith.constant 0 : i32
    %c0_i32_1 = arith.constant 0 : i32
    %c0_i32_2 = arith.constant 0 : i32
    return %c0_i32, %c0_i32_0, %c0_i32_1 : i32, i32, i32
  }
  func.func @transform_6(%arg0: i32) -> (i32, i32, i32) {
    %c0_i32 = arith.constant 0 : i32
    %c0_i32_0 = arith.constant 0 : i32
    %c0_i32_1 = arith.constant 0 : i32
    %c0_i32_2 = arith.constant 0 : i32
    return %c0_i32, %c0_i32_0, %c0_i32_1 : i32, i32, i32
  }
  func.func @transform_7(%arg0: i32) -> (i32, i32, i32) {
    %c0_i32 = arith.constant 0 : i32
    %c0_i32_0 = arith.constant 0 : i32
    %c0_i32_1 = arith.constant 0 : i32
    %c0_i32_2 = arith.constant 0 : i32
    return %c0_i32, %c0_i32_0, %c0_i32_1 : i32, i32, i32
  }
  func.func @transform_8(%arg0: i32) -> (i32, i32, i32) {
    %c0_i32 = arith.constant 0 : i32
    %c0_i32_0 = arith.constant 0 : i32
    %c0_i32_1 = arith.constant 0 : i32
    %c0_i32_2 = arith.constant 0 : i32
    return %c0_i32, %c0_i32_0, %c0_i32_1 : i32, i32, i32
  }
  func.func @transform_9(%arg0: i32) -> (i32, i32, i32) {
    %c0_i32 = arith.constant 0 : i32
    %c0_i32_0 = arith.constant 0 : i32
    %c0_i32_1 = arith.constant 0 : i32
    %c0_i32_2 = arith.constant 0 : i32
    return %c0_i32, %c0_i32_0, %c0_i32_1 : i32, i32, i32
  }
  func.func @transform_10(%arg0: i32) -> (i32, i32) {
    %c0_i32 = arith.constant 0 : i32
    %c0_i32_0 = arith.constant 0 : i32
    %c0_i32_1 = arith.constant 0 : i32
    return %c0_i32, %c0_i32_0 : i32, i32
  }
  func.func @transform_11(%arg0: i32) -> (i32, i32) {
    %c0_i32 = arith.constant 0 : i32
    %c0_i32_0 = arith.constant 0 : i32
    %c0_i32_1 = arith.constant 0 : i32
    return %c0_i32, %c0_i32_0 : i32, i32
  }
  func.func @transform_12(%arg0: i32) -> (i32, i32) {
    %c0_i32 = arith.constant 0 : i32
    %c0_i32_0 = arith.constant 0 : i32
    %c0_i32_1 = arith.constant 0 : i32
    return %c0_i32, %c0_i32_0 : i32, i32
  }
  func.func @transform_13(%arg0: i32) -> (i32, i32) {
    %c0_i32 = arith.constant 0 : i32
    %c0_i32_0 = arith.constant 0 : i32
    %c0_i32_1 = arith.constant 0 : i32
    return %c0_i32, %c0_i32_0 : i32, i32
  }
  func.func @transform_14(%arg0: i32) -> (i32, i32, i32) {
    %c0_i32 = arith.constant 0 : i32
    %c0_i32_0 = arith.constant 0 : i32
    %c0_i32_1 = arith.constant 0 : i32
    return %arg0, %c0_i32, %c0_i32_0 : i32, i32, i32
  }
}

</mosaic_0001>

<llo_original>
// kernel: roberta_forward.1
$region0: #{roberta_forward.1}
  #allocation0 [shape = 'u32[]', space=smem, size = 0x4, offset = 0x4, fixed_abs, tag = 'smem constant byte address 0x4 - core index']
  #allocation1 [shape = 'u32[72,128]{1,0:T(1,128)}', space=vmem, size = 0x9000, scoped, tag = 'internal scratch']
  %s0 = inlined_call_operand.vmem [shape: f32[2,8,32], index: 0, kind: input, shape index: {}]
  %s1 = inlined_call_operand.vmem [shape: f32[2,1,8], index: 1, kind: input, shape index: {}]
  %s2 = inlined_call_operand.vmem [shape: f32[2,32], index: 2, kind: input, shape index: {}]
  %s3 = inlined_call_operand.vmem [shape: bf16[2,32,96], index: 3, kind: input, shape index: {}]
  %s4 = inlined_call_operand.vmem [shape: f32[2,1,96], index: 4, kind: input, shape index: {}]
  %s5 = inlined_call_operand.vmem [shape: bf16[2,32,32], index: 5, kind: input, shape index: {}]
  %s6 = inlined_call_operand.vmem [shape: f32[2,6,32], index: 6, kind: input, shape index: {}]
  %s7 = inlined_call_operand.vmem [shape: bf16[2,32,64], index: 7, kind: input, shape index: {}]
  %s8 = inlined_call_operand.vmem [shape: f32[2,1,64], index: 8, kind: input, shape index: {}]
  %s9 = inlined_call_operand.vmem [shape: bf16[2,64,32], index: 9, kind: input, shape index: {}]
  %s10 = inlined_call_operand.vmem [shape: bf16[32,32], index: 10, kind: input, shape index: {}]
  %s11 = inlined_call_operand.vmem [shape: f32[1,32], index: 11, kind: input, shape index: {}]
  %s12 = inlined_call_operand.vmem [shape: bf16[32,2], index: 12, kind: input, shape index: {}]
  %s13 = inlined_call_operand.vmem [shape: f32[1,2], index: 13, kind: input, shape index: {}]
  %s14 = inlined_call_operand.hbm [shape: f32[2,1,2], index: 14, kind: output, shape index: {}]
  %s15 = sld [smem:[#allocation0]]
  $region89: #{roberta_forward.1} parent=0
    _
  %s17 = ssub.s32 1, %s15
  %s18 = scalar_select 0, %s17, %s15
  $region1: #{roberta_forward.1} parent=0
    #allocation2 [shape = 'u8[1024]{0}', space=vmem, size = 0x400, scoped, tag = 'output window, operand 0']
    #allocation3 [shape = 's32[2]{0}', space=sflag, size = 0x8, scoped, tag = 'scoped memory for roberta_forward.1']
    %19 = vsyncpa [#allocation3], 0
    %s20 = scalar_lea.sflag [#allocation3], 1
    %21 = vsyncpa %s20, 0
    loop: start=0, step=1, limit=4
    $region2: #{roberta_forward.1} parent=1 // loop_pre_header
      _
    $region3: #{roberta_forward.1} parent=1 // loop_header
      %s23 = sphi 0, %s27
      %p24 = scmp.ge.s32.totalorder %s23, 4
      %s33 = sphi 0, %s35
      %s36 = sphi 0, %s33
      %s37 = sphi 0, %s36
      %s53 = sphi 0, %s37
      %s59 = sphi 0, %s61
      %s62 = sphi 0, %s59
      %s63 = sphi 0, %s62
      %s79 = sphi 0, %s63
      %s83 = sphi 0, %s83
      %s85 = sphi 0, %s83
      %s86 = sphi 0, %s85
      %s100 = sphi 0, %s86
      %s104 = sphi 0, %s104
      %s106 = sphi 0, %s104
      %s107 = sphi 0, %s106
      %s121 = sphi 0, %s107
      %s125 = sphi 0, %s125
      %s127 = sphi 0, %s125
      %s128 = sphi 0, %s127
      %s142 = sphi 0, %s128
      %s146 = sphi 0, %s146
      %s148 = sphi 0, %s146
      %s149 = sphi 0, %s148
      %s163 = sphi 0, %s149
      %s167 = sphi 0, %s167
      %s169 = sphi 0, %s167
      %s170 = sphi 0, %s169
      %s184 = sphi 0, %s170
      %s188 = sphi 0, %s188
      %s190 = sphi 0, %s188
      %s191 = sphi 0, %s190
      %s205 = sphi 0, %s191
      %s209 = sphi 0, %s209
      %s211 = sphi 0, %s209
      %s212 = sphi 0, %s211
      %s226 = sphi 0, %s212
      %s230 = sphi 0, %s230
      %s232 = sphi 0, %s230
      %s233 = sphi 0, %s232
      %s247 = sphi 0, %s233
      %s251 = sphi 0, %s251
      %s253 = sphi 0, %s251
      %s254 = sphi 0, %s253
      %s268 = sphi 0, %s254
      %s272 = sphi 0, %s272
      %s274 = sphi 0, %s272
      %s275 = sphi 0, %s274
      %s289 = sphi 0, %s275
      %s293 = sphi 0, %s293
      %s295 = sphi 0, %s293
      %s296 = sphi 0, %s295
      %s310 = sphi 0, %s296
      %s314 = sphi 0, %s314
      %s316 = sphi 0, %s314
      %s317 = sphi 0, %s316
      %s331 = sphi 0, %s317
      %s337 = sphi 0, %s339
      %s340 = sphi 0, %s337
      %s341 = sphi 0, %s340
      %s357 = sphi 0, %s341
    $region4: #{roberta_forward.1} parent=1 // loop_header_branch
      %26 = sbr.rel (%p24) target = $region8
    $region5: #{roberta_forward.1} parent=1 // loop_body
      %s28 = ssub.s32 %s23, 1
      %s29 = ssub.s32 %s23, 2
      %s30 = sadd.s32 %s23, 1
      %s31 = ssub.s32 %s23, %s30
      %p32 = scmp.eq.s32.totalorder %s31, 0
      %s34 = sadd.s32 %s33, 1
      %s35 = scalar_select %p32, %s33, %s34
      %p38 = pneg %p32
      %p39 = scmp.eq.s32.totalorder %s23, 1
      %p40 = por %p38, %p39
      %p41 = scmp.ne.s32.totalorder %s33, %s36
      %p42 = scmp.eq.s32.totalorder %s23, 0
      %p43 = por %p41, %p42
      %p44 = scmp.ne.s32.totalorder %s33, %s36
      %p45 = scmp.eq.s32.totalorder %s28, 1
      %p46 = por %p44, %p45
      %p47 = scmp.ne.s32.totalorder %s36, %s37
      %p48 = scmp.eq.s32.totalorder %s28, 0
      %p49 = por %p47, %p48
      %p50 = scmp.ne.s32.totalorder %s36, %s37
      %p51 = scmp.eq.s32.totalorder %s29, 1
      %p52 = por %p50, %p51
      %p54 = scmp.ne.s32.totalorder %s37, %s53
      %p55 = scmp.eq.s32.totalorder %s29, 0
      %p56 = por %p54, %p55
      %s57 = ssub.s32 %s23, %s30
      %p58 = scmp.eq.s32.totalorder %s57, 0
      %s60 = sadd.s32 %s59, 1
      %s61 = scalar_select %p58, %s59, %s60
      %p64 = pneg %p58
      %p65 = scmp.eq.s32.totalorder %s23, 1
      %p66 = por %p64, %p65
      %p67 = scmp.ne.s32.totalorder %s59, %s62
      %p68 = scmp.eq.s32.totalorder %s23, 0
      %p69 = por %p67, %p68
      %p70 = scmp.ne.s32.totalorder %s59, %s62
      %p71 = scmp.eq.s32.totalorder %s28, 1
      %p72 = por %p70, %p71
      %p73 = scmp.ne.s32.totalorder %s62, %s63
      %p74 = scmp.eq.s32.totalorder %s28, 0
      %p75 = por %p73, %p74
      %p76 = scmp.ne.s32.totalorder %s62, %s63
      %p77 = scmp.eq.s32.totalorder %s29, 1
      %p78 = por %p76, %p77
      %p80 = scmp.ne.s32.totalorder %s63, %s79
      %p81 = scmp.eq.s32.totalorder %s29, 0
      %p82 = por %p80, %p81
      %s84 = sadd.s32 %s83, 1
      %p87 = scmp.eq.s32.totalorder %s23, 1
      %p88 = scmp.ne.s32.totalorder %s83, %s85
      %p89 = scmp.eq.s32.totalorder %s23, 0
      %p90 = por %p88, %p89
      %p91 = scmp.ne.s32.totalorder %s83, %s85
      %p92 = scmp.eq.s32.totalorder %s28, 1
      %p93 = por %p91, %p92
      %p94 = scmp.ne.s32.totalorder %s85, %s86
      %p95 = scmp.eq.s32.totalorder %s28, 0
      %p96 = por %p94, %p95
      %p97 = scmp.ne.s32.totalorder %s85, %s86
      %p98 = scmp.eq.s32.totalorder %s29, 1
      %p99 = por %p97, %p98
      %p101 = scmp.ne.s32.totalorder %s86, %s100
      %p102 = scmp.eq.s32.totalorder %s29, 0
      %p103 = por %p101, %p102
      %s105 = sadd.s32 %s104, 1
      %p108 = scmp.eq.s32.totalorder %s23, 1
      %p109 = scmp.ne.s32.totalorder %s104, %s106
      %p110 = scmp.eq.s32.totalorder %s23, 0
      %p111 = por %p109, %p110
      %p112 = scmp.ne.s32.totalorder %s104, %s106
      %p113 = scmp.eq.s32.totalorder %s28, 1
      %p114 = por %p112, %p113
      %p115 = scmp.ne.s32.totalorder %s106, %s107
      %p116 = scmp.eq.s32.totalorder %s28, 0
      %p117 = por %p115, %p116
      %p118 = scmp.ne.s32.totalorder %s106, %s107
      %p119 = scmp.eq.s32.totalorder %s29, 1
      %p120 = por %p118, %p119
      %p122 = scmp.ne.s32.totalorder %s107, %s121
      %p123 = scmp.eq.s32.totalorder %s29, 0
      %p124 = por %p122, %p123
      %s126 = sadd.s32 %s125, 1
      %p129 = scmp.eq.s32.totalorder %s23, 1
      %p130 = scmp.ne.s32.totalorder %s125, %s127
      %p131 = scmp.eq.s32.totalorder %s23, 0
      %p132 = por %p130, %p131
      %p133 = scmp.ne.s32.totalorder %s125, %s127
      %p134 = scmp.eq.s32.totalorder %s28, 1
      %p135 = por %p133, %p134
      %p136 = scmp.ne.s32.totalorder %s127, %s128
      %p137 = scmp.eq.s32.totalorder %s28, 0
      %p138 = por %p136, %p137
      %p139 = scmp.ne.s32.totalorder %s127, %s128
      %p140 = scmp.eq.s32.totalorder %s29, 1
      %p141 = por %p139, %p140
      %p143 = scmp.ne.s32.totalorder %s128, %s142
      %p144 = scmp.eq.s32.totalorder %s29, 0
      %p145 = por %p143, %p144
      %s147 = sadd.s32 %s146, 1
      %p150 = scmp.eq.s32.totalorder %s23, 1
      %p151 = scmp.ne.s32.totalorder %s146, %s148
      %p152 = scmp.eq.s32.totalorder %s23, 0
      %p153 = por %p151, %p152
      %p154 = scmp.ne.s32.totalorder %s146, %s148
      %p155 = scmp.eq.s32.totalorder %s28, 1
      %p156 = por %p154, %p155
      %p157 = scmp.ne.s32.totalorder %s148, %s149
      %p158 = scmp.eq.s32.totalorder %s28, 0
      %p159 = por %p157, %p158
      %p160 = scmp.ne.s32.totalorder %s148, %s149
      %p161 = scmp.eq.s32.totalorder %s29, 1
      %p162 = por %p160, %p161
      %p164 = scmp.ne.s32.totalorder %s149, %s163
      %p165 = scmp.eq.s32.totalorder %s29, 0
      %p166 = por %p164, %p165
      %s168 = sadd.s32 %s167, 1
      %p171 = scmp.eq.s32.totalorder %s23, 1
      %p172 = scmp.ne.s32.totalorder %s167, %s169
      %p173 = scmp.eq.s32.totalorder %s23, 0
      %p174 = por %p172, %p173
      %p175 = scmp.ne.s32.totalorder %s167, %s169
      %p176 = scmp.eq.s32.totalorder %s28, 1
      %p177 = por %p175, %p176
      %p178 = scmp.ne.s32.totalorder %s169, %s170
      %p179 = scmp.eq.s32.totalorder %s28, 0
      %p180 = por %p178, %p179
      %p181 = scmp.ne.s32.totalorder %s169, %s170
      %p182 = scmp.eq.s32.totalorder %s29, 1
      %p183 = por %p181, %p182
      %p185 = scmp.ne.s32.totalorder %s170, %s184
      %p186 = scmp.eq.s32.totalorder %s29, 0
      %p187 = por %p185, %p186
      %s189 = sadd.s32 %s188, 1
      %p192 = scmp.eq.s32.totalorder %s23, 1
      %p193 = scmp.ne.s32.totalorder %s188, %s190
      %p194 = scmp.eq.s32.totalorder %s23, 0
      %p195 = por %p193, %p194
      %p196 = scmp.ne.s32.totalorder %s188, %s190
      %p197 = scmp.eq.s32.totalorder %s28, 1
      %p198 = por %p196, %p197
      %p199 = scmp.ne.s32.totalorder %s190, %s191
      %p200 = scmp.eq.s32.totalorder %s28, 0
      %p201 = por %p199, %p200
      %p202 = scmp.ne.s32.totalorder %s190, %s191
      %p203 = scmp.eq.s32.totalorder %s29, 1
      %p204 = por %p202, %p203
      %p206 = scmp.ne.s32.totalorder %s191, %s205
      %p207 = scmp.eq.s32.totalorder %s29, 0
      %p208 = por %p206, %p207
      %s210 = sadd.s32 %s209, 1
      %p213 = scmp.eq.s32.totalorder %s23, 1
      %p214 = scmp.ne.s32.totalorder %s209, %s211
      %p215 = scmp.eq.s32.totalorder %s23, 0
      %p216 = por %p214, %p215
      %p217 = scmp.ne.s32.totalorder %s209, %s211
      %p218 = scmp.eq.s32.totalorder %s28, 1
      %p219 = por %p217, %p218
      %p220 = scmp.ne.s32.totalorder %s211, %s212
      %p221 = scmp.eq.s32.totalorder %s28, 0
      %p222 = por %p220, %p221
      %p223 = scmp.ne.s32.totalorder %s211, %s212
      %p224 = scmp.eq.s32.totalorder %s29, 1
      %p225 = por %p223, %p224
      %p227 = scmp.ne.s32.totalorder %s212, %s226
      %p228 = scmp.eq.s32.totalorder %s29, 0
      %p229 = por %p227, %p228
      %s231 = sadd.s32 %s230, 1
      %p234 = scmp.eq.s32.totalorder %s23, 1
      %p235 = scmp.ne.s32.totalorder %s230, %s232
      %p236 = scmp.eq.s32.totalorder %s23, 0
      %p237 = por %p235, %p236
      %p238 = scmp.ne.s32.totalorder %s230, %s232
      %p239 = scmp.eq.s32.totalorder %s28, 1
      %p240 = por %p238, %p239
      %p241 = scmp.ne.s32.totalorder %s232, %s233
      %p242 = scmp.eq.s32.totalorder %s28, 0
      %p243 = por %p241, %p242
      %p244 = scmp.ne.s32.totalorder %s232, %s233
      %p245 = scmp.eq.s32.totalorder %s29, 1
      %p246 = por %p244, %p245
      %p248 = scmp.ne.s32.totalorder %s233, %s247
      %p249 = scmp.eq.s32.totalorder %s29, 0
      %p250 = por %p248, %p249
      %s252 = sadd.s32 %s251, 1
      %p255 = scmp.eq.s32.totalorder %s23, 1
      %p256 = scmp.ne.s32.totalorder %s251, %s253
      %p257 = scmp.eq.s32.totalorder %s23, 0
      %p258 = por %p256, %p257
      %p259 = scmp.ne.s32.totalorder %s251, %s253
      %p260 = scmp.eq.s32.totalorder %s28, 1
      %p261 = por %p259, %p260
      %p262 = scmp.ne.s32.totalorder %s253, %s254
      %p263 = scmp.eq.s32.totalorder %s28, 0
      %p264 = por %p262, %p263
      %p265 = scmp.ne.s32.totalorder %s253, %s254
      %p266 = scmp.eq.s32.totalorder %s29, 1
      %p267 = por %p265, %p266
      %p269 = scmp.ne.s32.totalorder %s254, %s268
      %p270 = scmp.eq.s32.totalorder %s29, 0
      %p271 = por %p269, %p270
      %s273 = sadd.s32 %s272, 1
      %p276 = scmp.eq.s32.totalorder %s23, 1
      %p277 = scmp.ne.s32.totalorder %s272, %s274
      %p278 = scmp.eq.s32.totalorder %s23, 0
      %p279 = por %p277, %p278
      %p280 = scmp.ne.s32.totalorder %s272, %s274
      %p281 = scmp.eq.s32.totalorder %s28, 1
      %p282 = por %p280, %p281
      %p283 = scmp.ne.s32.totalorder %s274, %s275
      %p284 = scmp.eq.s32.totalorder %s28, 0
      %p285 = por %p283, %p284
      %p286 = scmp.ne.s32.totalorder %s274, %s275
      %p287 = scmp.eq.s32.totalorder %s29, 1
      %p288 = por %p286, %p287
      %p290 = scmp.ne.s32.totalorder %s275, %s289
      %p291 = scmp.eq.s32.totalorder %s29, 0
      %p292 = por %p290, %p291
      %s294 = sadd.s32 %s293, 1
      %p297 = scmp.eq.s32.totalorder %s23, 1
      %p298 = scmp.ne.s32.totalorder %s293, %s295
      %p299 = scmp.eq.s32.totalorder %s23, 0
      %p300 = por %p298, %p299
      %p301 = scmp.ne.s32.totalorder %s293, %s295
      %p302 = scmp.eq.s32.totalorder %s28, 1
      %p303 = por %p301, %p302
      %p304 = scmp.ne.s32.totalorder %s295, %s296
      %p305 = scmp.eq.s32.totalorder %s28, 0
      %p306 = por %p304, %p305
      %p307 = scmp.ne.s32.totalorder %s295, %s296
      %p308 = scmp.eq.s32.totalorder %s29, 1
      %p309 = por %p307, %p308
      %p311 = scmp.ne.s32.totalorder %s296, %s310
      %p312 = scmp.eq.s32.totalorder %s29, 0
      %p313 = por %p311, %p312
      %s315 = sadd.s32 %s314, 1
      %p318 = scmp.eq.s32.totalorder %s23, 1
      %p319 = scmp.ne.s32.totalorder %s314, %s316
      %p320 = scmp.eq.s32.totalorder %s23, 0
      %p321 = por %p319, %p320
      %p322 = scmp.ne.s32.totalorder %s314, %s316
      %p323 = scmp.eq.s32.totalorder %s28, 1
      %p324 = por %p322, %p323
      %p325 = scmp.ne.s32.totalorder %s316, %s317
      %p326 = scmp.eq.s32.totalorder %s28, 0
      %p327 = por %p325, %p326
      %p328 = scmp.ne.s32.totalorder %s316, %s317
      %p329 = scmp.eq.s32.totalorder %s29, 1
      %p330 = por %p328, %p329
      %p332 = scmp.ne.s32.totalorder %s317, %s331
      %p333 = scmp.eq.s32.totalorder %s29, 0
      %p334 = por %p332, %p333
      %s335 = ssub.s32 %s23, %s30
      %p336 = scmp.eq.s32.totalorder %s335, 0
      %s338 = sadd.s32 %s337, 1
      %s339 = scalar_select %p336, %s337, %s338
      %p342 = pneg %p336
      %p343 = scmp.eq.s32.totalorder %s23, 1
      %p344 = por %p342, %p343
      %p345 = scmp.ne.s32.totalorder %s337, %s340
      %p346 = scmp.eq.s32.totalorder %s23, 0
      %p347 = por %p345, %p346
      %p348 = scmp.ne.s32.totalorder %s337, %s340
      %p349 = scmp.eq.s32.totalorder %s28, 1
      %p350 = por %p348, %p349
      %p351 = scmp.ne.s32.totalorder %s340, %s341
      %p352 = scmp.eq.s32.totalorder %s28, 0
      %p353 = por %p351, %p352
      %p354 = scmp.ne.s32.totalorder %s340, %s341
      %p355 = scmp.eq.s32.totalorder %s29, 1
      %p356 = por %p354, %p355
      %p358 = scmp.ne.s32.totalorder %s341, %s357
      %p359 = scmp.eq.s32.totalorder %s29, 0
      %p360 = por %p358, %p359
      %p361 = scmp.le.s32.totalorder 1, %s23
      %p362 = scmp.lt.s32.totalorder %s23, 3
      %p363 = pnand %p361, %p362
      %p364 = pneg %p363
      // Predicated region
      $region9: #{roberta_forward.1} parent=5 // pred_check
        _
      $region10: #{roberta_forward.1} parent=5 // pred_check_branch
        %366 = sbr.rel (%p363) target = $region12
      $region11: #{roberta_forward.1} parent=5 // pred_region
        %s367 = ssub.s32 %s23, 1
        // Predicated region
        $region13: #{roberta_forward.1} parent=11 // pred_check
          %p368 = pneg %p96
        $region14: #{roberta_forward.1} parent=11 // pred_check_branch
          %370 = sbr.rel (%p368) target = $region16
        $region15: #{roberta_forward.1} parent=11 // pred_region
          _
        $region16: #{roberta_forward.1} parent=11 // pred_fallthru
          _
        // Predicated region
        $region17: #{roberta_forward.1} parent=11 // pred_check
          %p371 = pneg %p117
        $region18: #{roberta_forward.1} parent=11 // pred_check_branch
          %373 = sbr.rel (%p371) target = $region20
        $region19: #{roberta_forward.1} parent=11 // pred_region
          _
        $region20: #{roberta_forward.1} parent=11 // pred_fallthru
          _
        // Predicated region
        $region21: #{roberta_forward.1} parent=11 // pred_check
          %p374 = pneg %p138
        $region22: #{roberta_forward.1} parent=11 // pred_check_branch
          %376 = sbr.rel (%p374) target = $region24
        $region23: #{roberta_forward.1} parent=11 // pred_region
          _
        $region24: #{roberta_forward.1} parent=11 // pred_fallthru
          _
        // Predicated region
        $region25: #{roberta_forward.1} parent=11 // pred_check
          %p377 = pneg %p159
        $region26: #{roberta_forward.1} parent=11 // pred_check_branch
          %379 = sbr.rel (%p377) target = $region28
        $region27: #{roberta_forward.1} parent=11 // pred_region
          _
        $region28: #{roberta_forward.1} parent=11 // pred_fallthru
          _
        // Predicated region
        $region29: #{roberta_forward.1} parent=11 // pred_check
          %p380 = pneg %p180
        $region30: #{roberta_forward.1} parent=11 // pred_check_branch
          %382 = sbr.rel (%p380) target = $region32
        $region31: #{roberta_forward.1} parent=11 // pred_region
          _
        $region32: #{roberta_forward.1} parent=11 // pred_fallthru
          _
        // Predicated region
        $region33: #{roberta_forward.1} parent=11 // pred_check
          %p383 = pneg %p201
        $region34: #{roberta_forward.1} parent=11 // pred_check_branch
          %385 = sbr.rel (%p383) target = $region36
        $region35: #{roberta_forward.1} parent=11 // pred_region
          _
        $region36: #{roberta_forward.1} parent=11 // pred_fallthru
          _
        // Predicated region
        $region37: #{roberta_forward.1} parent=11 // pred_check
          %p386 = pneg %p222
        $region38: #{roberta_forward.1} parent=11 // pred_check_branch
          %388 = sbr.rel (%p386) target = $region40
        $region39: #{roberta_forward.1} parent=11 // pred_region
          _
        $region40: #{roberta_forward.1} parent=11 // pred_fallthru
          _
        // Predicated region
        $region41: #{roberta_forward.1} parent=11 // pred_check
          %p389 = pneg %p243
        $region42: #{roberta_forward.1} parent=11 // pred_check_branch
          %391 = sbr.rel (%p389) target = $region44
        $region43: #{roberta_forward.1} parent=11 // pred_region
          _
        $region44: #{roberta_forward.1} parent=11 // pred_fallthru
          _
        // Predicated region
        $region45: #{roberta_forward.1} parent=11 // pred_check
          %p392 = pneg %p264
        $region46: #{roberta_forward.1} parent=11 // pred_check_branch
          %394 = sbr.rel (%p392) target = $region48
        $region47: #{roberta_forward.1} parent=11 // pred_region
          _
        $region48: #{roberta_forward.1} parent=11 // pred_fallthru
          _
        // Predicated region
        $region49: #{roberta_forward.1} parent=11 // pred_check
          %p395 = pneg %p285
        $region50: #{roberta_forward.1} parent=11 // pred_check_branch
          %397 = sbr.rel (%p395) target = $region52
        $region51: #{roberta_forward.1} parent=11 // pred_region
          _
        $region52: #{roberta_forward.1} parent=11 // pred_fallthru
          _
        // Predicated region
        $region53: #{roberta_forward.1} parent=11 // pred_check
          %p398 = pneg %p306
        $region54: #{roberta_forward.1} parent=11 // pred_check_branch
          %400 = sbr.rel (%p398) target = $region56
        $region55: #{roberta_forward.1} parent=11 // pred_region
          _
        $region56: #{roberta_forward.1} parent=11 // pred_fallthru
          _
        // Predicated region
        $region57: #{roberta_forward.1} parent=11 // pred_check
          %p401 = pneg %p327
        $region58: #{roberta_forward.1} parent=11 // pred_check_branch
          %403 = sbr.rel (%p401) target = $region60
        $region59: #{roberta_forward.1} parent=11 // pred_region
          _
        $region60: #{roberta_forward.1} parent=11 // pred_fallthru
          _
      $region12: #{roberta_forward.1} parent=5 // pred_fallthru
        _
      %p404 = scmp.lt.s32.totalorder %s23, 2
      // Predicated region
      $region61: #{roberta_forward.1} parent=5 // pred_check
        %p405 = pneg %p404
      $region62: #{roberta_forward.1} parent=5 // pred_check_branch
        %407 = sbr.rel (%p405) target = $region64
      $region63: #{roberta_forward.1} parent=5 // pred_region
        // Predicated region
        $region65: #{roberta_forward.1} parent=63 // pred_check
          %p408 = pneg %p43
        $region66: #{roberta_forward.1} parent=63 // pred_check_branch
          %410 = sbr.rel (%p408) target = $region68
        $region67: #{roberta_forward.1} parent=63 // pred_region
          %p411 = scmp.lt.s32.totalorder %s23, 1
          %s412 = scalar_select %p411, %s23, 1
          %s413 = smul.addr %s412, 8
          %s414 = scalar_lea.vmem %s0, %s413
        $region68: #{roberta_forward.1} parent=63 // pred_fallthru
          _
        // Predicated region
        $region69: #{roberta_forward.1} parent=63 // pred_check
          %p415 = pneg %p69
        $region70: #{roberta_forward.1} parent=63 // pred_check_branch
          %417 = sbr.rel (%p415) target = $region72
        $region71: #{roberta_forward.1} parent=63 // pred_region
          %p418 = scmp.lt.s32.totalorder %s23, 1
          %s419 = scalar_select %p418, %s23, 1
          %s420 = scalar_lea.vmem %s1, %s419
        $region72: #{roberta_forward.1} parent=63 // pred_fallthru
          _
      $region64: #{roberta_forward.1} parent=5 // pred_fallthru
        _
      %p421 = scmp.le.s32.totalorder 1, %s23
      %p422 = scmp.lt.s32.totalorder %s23, 3
      %p423 = pnand %p421, %p422
      %p424 = pneg %p423
      // Predicated region
      $region73: #{roberta_forward.1} parent=5 // pred_check
        _
      $region74: #{roberta_forward.1} parent=5 // pred_check_branch
        %426 = sbr.rel (%p423) target = $region76
      $region75: #{roberta_forward.1} parent=5 // pred_region
        %s427 = ssub.s32 %s23, 1
        %p428 = scmp.lt.s32.totalorder %s28, 1
        %s429 = scalar_select %p428, %s28, 1
        %s430 = smul.addr %s429, 8
        %s431 = scalar_lea.vmem %s0, %s430
        %p432 = pneg %p49
        %p433 = pneg %p46
        %p434 = scmp.lt.s32.totalorder %s28, 1
        %s435 = scalar_select %p434, %s28, 1
        %s436 = scalar_lea.vmem %s1, %s435
        %p437 = pneg %p75
        %p438 = pneg %p72
        %p439 = pneg %p96
        %p440 = pneg %p93
        %p441 = pneg %p117
        %p442 = pneg %p114
        %p443 = pneg %p138
        %p444 = pneg %p135
        %p445 = pneg %p159
        %p446 = pneg %p156
        %p447 = pneg %p180
        %p448 = pneg %p177
        %p449 = pneg %p201
        %p450 = pneg %p198
        %p451 = pneg %p222
        %p452 = pneg %p219
        %p453 = pneg %p243
        %p454 = pneg %p240
        %p455 = pneg %p264
        %p456 = pneg %p261
        %p457 = pneg %p285
        %p458 = pneg %p282
        %p459 = pneg %p306
        %p460 = pneg %p303
        %p461 = pneg %p327
        %p462 = pneg %p324
        %p463 = pneg %p353
        %p464 = pneg %p350
        %s465 = sand.u32 %s340, 1
        %s466 = scalar_lea.sflag [#allocation3], %s465
        %s467 = sand.u32 %s340, 1
        %s468 = scalar_lea.vmem [#allocation2], %s467
        %p469 = scmp.lt.s32.totalorder %s28, 1
        %s470 = scalar_select %p469, %s28, 1
        %s471 = smul.addr %s470, 8
        %s472 = scalar_lea.vmem %s0, %s471
        %p473 = scmp.lt.s32.totalorder %s28, 1
        %s474 = scalar_select %p473, %s28, 1
        %s475 = scalar_lea.vmem %s1, %s474
        %v477 = vld [vmem:[%s472] sm:$0xff]
        %v478 = vld [vmem:[%s2] sm:$0x1]
        %v479 = vld [vmem:[%s2 + $0x1] sm:$0x1]
        %vm480 = vcmask 261120
        %v481 = vsel %vm480, %v477, 0.0
        %482 = vadd.xlane.f32.xlu0 %v481
        %v483 = vpop.xlane.xlu0 %482
        %v484 = vrcp.pop 32.0
        %v485 = vmul.f32 32.0, %v484
        %v486 = vsub.f32 1.0, %v485
        %v487 = vmul.f32 %v484, %v486
        %v488 = vadd.f32 %v484, %v487
        %vm489 = vweird.f32 %v484
        %v490 = vsel %vm489, %v484, %v488
        %v491 = vmul.f32 %v483, %v490
        %v492 = vsub.f32 %v477, %v491
        %v493 = vmul.f32 %v492, %v492
        %v494 = vsel %vm480, %v493, 0.0
        %495 = vadd.xlane.f32.xlu0 %v494
        %v496 = vpop.xlane.xlu0 %495
        %v497 = vmul.f32 %v496, %v490
        %v498 = vadd.f32 %v497, 1e-05
        %v499 = vrsqrt.pop %v498
        %v500 = vmul.f32 %v499, %v498
        %v501 = vmul.f32 %v500, %v499
        %v502 = vmul.f32 0.5, %v501
        %v503 = vsub.f32 1.5, %v502
        %v504 = vmul.f32 %v499, %v503
        %vm505 = vweird.f32 %v498
        %vm506 = vweird.f32 %v499
        %vm507 = vmor %vm505, %vm506
        %v508 = vsel %vm507, %v499, %v504
        %v509 = vmul.f32 %v492, %v508
        %v510 = vperm.slane %v478, 0
        %v511 = vmul.f32 %v509, %v510
        %v512 = vperm.slane %v479, 0
        %v513 = vadd.f32 %v511, %v512
        %v514 = vld [vmem:[%s475] sm:$0x1]
        %v515 = vsub.f32 1.0, %v514
        %v516 = vmul.f32 %v515, -10000.0
        %v517 = vld [vmem:[%s6] sm:$0x3f]
        %v518 = vld [vmem:[%s3] sm:$0xf]
        %v519 = vld [vmem:[%s3 + $0x4] sm:$0xf]
        %v520 = vld [vmem:[%s3 + $0x8] sm:$0xf]
        %v521 = vld [vmem:[%s3 + $0xc] sm:$0xf]
        %v522 = vpack.c.bf16 %v513, %v513
        %v523 = vld [vmem:[%s4] sm:$0x1]
        %v525 = vperm.slane %v523, 0
        %v531 = vunpack.c.l.b16 %v518
        %v532 = vunpack.c.l.b16 %v519
        %v533 = vunpack.c.l.b16 %v520
        %v534 = vunpack.c.l.b16 %v521
        %v535 = vpack.c.b16 %v532, %v531
        %v536 = vpack.c.b16 %v534, %v533
        %v540 = vsel %vm480, %v522, 0
        %542 = vmatpush.bf16.msra.mxu0 0
        %543 = vmatpush.bf16.msra.mxu0 0
        %544 = vmatpush.bf16.msra.mxu0 0
        %545 = vmatpush.bf16.msra.mxu0 0
        %546 = vmatpush.bf16.msra.mxu0 0
        %547 = vmatpush.bf16.msra.mxu0 0
        %548 = vmatpush.bf16.msra.mxu0 %v536
        %549 = vmatpush.bf16.msra.mxu0 %v535
        %550 = vmatmul.bf16.gmra.mxu0 %v540
        %v551 = vpop.f32.mrf.mxu0
        %v552 = vadd.f32 %v525, %v551
        %v553 = vpop.f32.mrf.mxu0
        %554 = vdwg.mxu0
        %v555 = vpack.c.bf16 %v552, %v552
        %v557 = vunpack.c.l.b16 %v555
        %v558 = vpack.c.b16 %v557, %v557
        %559 = vrot.lane.b32.xlu0 %v558, 96
        %v560 = vpop.permute.xlu0 %559
        %vm561 = vcmask 64512
        %v563 = vsel %vm561, %v555, 0
        %v566 = vsel %vm561, %v560, 0
        %568 = vmatpush.bf16.xpose.msra.mxu0 0
        %569 = vmatpush.bf16.xpose.msra.mxu0 0
        %570 = vmatpush.bf16.xpose.msra.mxu0 0
        %571 = vmatpush.bf16.xpose.msra.mxu0 0
        %572 = vmatpush.bf16.xpose.msra.mxu0 0
        %573 = vmatpush.bf16.xpose.msra.mxu0 0
        %574 = vmatpush.bf16.xpose.msra.mxu0 0
        %575 = vmatpush.bf16.xpose.msra.mxu0 %v566
        %576 = vmatmul.bf16.gmra.mxu0 %v563
        %v577 = vpop.f32.mrf.mxu0
        %v578 = vadd.f32 0.0, %v577
        %v579 = vpop.f32.mrf.mxu0
        %580 = vdwg.mxu0
        %v581 = vmul.f32 %v578, 0.35355338
        %v583 = vperm.slane %v516, 0
        %v585 = vadd.f32 %v581, %v583
        %v586 = vsel %vm561, %v585, -inf
        %587 = vmax.xlane.f32.xlu0 %v586
        %v588 = vpop.xlane.xlu0 %587
        %v589 = vsub.f32 %v585, %v588
        %v590 = vmul.f32 %v589, 1.442695
        %v591 = vpow.pop %v590
        %v592 = vsel %vm561, %v591, 0.0
        %593 = vadd.xlane.f32.xlu0 %v592
        %v594 = vpop.xlane.xlu0 %593
        %v595 = vrcp.pop %v594
        %v596 = vmul.f32 %v591, %v595
        %v597 = vpack.c.bf16 %v596, %v596
        %598 = vrot.lane.b32.xlu0 %v558, 64
        %v599 = vpop.permute.xlu0 %598
        %v601 = vsel %vm561, %v597, 0
        %vm603 = vcmask 1043456
        %v605 = vsel %vm603, %v599, 0
        %607 = vmatpush.bf16.msra.mxu0 0
        %608 = vmatpush.bf16.msra.mxu0 0
        %609 = vmatpush.bf16.msra.mxu0 0
        %610 = vmatpush.bf16.msra.mxu0 0
        %611 = vmatpush.bf16.msra.mxu0 0
        %612 = vmatpush.bf16.msra.mxu0 0
        %613 = vmatpush.bf16.msra.mxu0 0
        %614 = vmatpush.bf16.msra.mxu0 %v605
        %615 = vmatmul.bf16.gmra.mxu0 %v601
        %v616 = vpop.f32.mrf.mxu0
        %v617 = vadd.f32 0.0, %v616
        %v618 = vpop.f32.mrf.mxu0
        %619 = vdwg.mxu0
        %620 = vrot.lane.b32.xlu0 %v558, 120
        %v621 = vpop.permute.xlu0 %620
        %622 = vrot.lane.b32.xlu0 %v558, 88
        %v623 = vpop.permute.xlu0 %622
        %v625 = vsel %vm561, %v621, 0
        %v628 = vsel %vm561, %v623, 0
        %630 = vmatpush.bf16.xpose.msra.mxu0 0
        %631 = vmatpush.bf16.xpose.msra.mxu0 0
        %632 = vmatpush.bf16.xpose.msra.mxu0 0
        %633 = vmatpush.bf16.xpose.msra.mxu0 0
        %634 = vmatpush.bf16.xpose.msra.mxu0 0
        %635 = vmatpush.bf16.xpose.msra.mxu0 0
        %636 = vmatpush.bf16.xpose.msra.mxu0 0
        %637 = vmatpush.bf16.xpose.msra.mxu0 %v628
        %638 = vmatmul.bf16.gmra.mxu0 %v625
        %v639 = vpop.f32.mrf.mxu0
        %v640 = vadd.f32 0.0, %v639
        %v641 = vpop.f32.mrf.mxu0
        %642 = vdwg.mxu0
        %v643 = vmul.f32 %v640, 0.35355338
        %v644 = vadd.f32 %v643, %v583
        %v645 = vsel %vm561, %v644, -inf
        %646 = vmax.xlane.f32.xlu0 %v645
        %v647 = vpop.xlane.xlu0 %646
        %v648 = vsub.f32 %v644, %v647
        %v649 = vmul.f32 %v648, 1.442695
        %v650 = vpow.pop %v649
        %v651 = vsel %vm561, %v650, 0.0
        %652 = vadd.xlane.f32.xlu0 %v651
        %v653 = vpop.xlane.xlu0 %652
        %v654 = vrcp.pop %v653
        %v655 = vmul.f32 %v650, %v654
        %v656 = vpack.c.bf16 %v655, %v655
        %657 = vrot.lane.b32.xlu0 %v558, 56
        %v658 = vpop.permute.xlu0 %657
        %v660 = vsel %vm561, %v656, 0
        %v663 = vsel %vm603, %v658, 0
        %665 = vmatpush.bf16.msra.mxu0 0
        %666 = vmatpush.bf16.msra.mxu0 0
        %667 = vmatpush.bf16.msra.mxu0 0
        %668 = vmatpush.bf16.msra.mxu0 0
        %669 = vmatpush.bf16.msra.mxu0 0
        %670 = vmatpush.bf16.msra.mxu0 0
        %671 = vmatpush.bf16.msra.mxu0 0
        %672 = vmatpush.bf16.msra.mxu0 %v663
        %673 = vmatmul.bf16.gmra.mxu0 %v660
        %v674 = vpop.f32.mrf.mxu0
        %v675 = vadd.f32 0.0, %v674
        %v676 = vpop.f32.mrf.mxu0
        %677 = vdwg.mxu0
        %678 = vrot.lane.b32.xlu0 %v558, 112
        %v679 = vpop.permute.xlu0 %678
        %680 = vrot.lane.b32.xlu0 %v558, 80
        %v681 = vpop.permute.xlu0 %680
        %v683 = vsel %vm561, %v679, 0
        %v686 = vsel %vm561, %v681, 0
        %688 = vmatpush.bf16.xpose.msra.mxu0 0
        %689 = vmatpush.bf16.xpose.msra.mxu0 0
        %690 = vmatpush.bf16.xpose.msra.mxu0 0
        %691 = vmatpush.bf16.xpose.msra.mxu0 0
        %692 = vmatpush.bf16.xpose.msra.mxu0 0
        %693 = vmatpush.bf16.xpose.msra.mxu0 0
        %694 = vmatpush.bf16.xpose.msra.mxu0 0
        %695 = vmatpush.bf16.xpose.msra.mxu0 %v686
        %696 = vmatmul.bf16.gmra.mxu0 %v683
        %v697 = vpop.f32.mrf.mxu0
        %v698 = vadd.f32 0.0, %v697
        %v699 = vpop.f32.mrf.mxu0
        %700 = vdwg.mxu0
        %v701 = vmul.f32 %v698, 0.35355338
        %v702 = vadd.f32 %v701, %v583
        %v703 = vsel %vm561, %v702, -inf
        %704 = vmax.xlane.f32.xlu0 %v703
        %v705 = vpop.xlane.xlu0 %704
        %v706 = vsub.f32 %v702, %v705
        %v707 = vmul.f32 %v706, 1.442695
        %v708 = vpow.pop %v707
        %v709 = vsel %vm561, %v708, 0.0
        %710 = vadd.xlane.f32.xlu0 %v709
        %v711 = vpop.xlane.xlu0 %710
        %v712 = vrcp.pop %v711
        %v713 = vmul.f32 %v708, %v712
        %v714 = vpack.c.bf16 %v713, %v713
        %715 = vrot.lane.b32.xlu0 %v558, 48
        %v716 = vpop.permute.xlu0 %715
        %v718 = vsel %vm561, %v714, 0
        %v721 = vsel %vm603, %v716, 0
        %723 = vmatpush.bf16.msra.mxu0 0
        %724 = vmatpush.bf16.msra.mxu0 0
        %725 = vmatpush.bf16.msra.mxu0 0
        %726 = vmatpush.bf16.msra.mxu0 0
        %727 = vmatpush.bf16.msra.mxu0 0
        %728 = vmatpush.bf16.msra.mxu0 0
        %729 = vmatpush.bf16.msra.mxu0 0
        %730 = vmatpush.bf16.msra.mxu0 %v721
        %731 = vmatmul.bf16.gmra.mxu0 %v718
        %v732 = vpop.f32.mrf.mxu0
        %v733 = vadd.f32 0.0, %v732
        %v734 = vpop.f32.mrf.mxu0
        %735 = vdwg.mxu0
        %736 = vrot.lane.b32.xlu0 %v558, 104
        %v737 = vpop.permute.xlu0 %736
        %738 = vrot.lane.b32.xlu0 %v558, 72
        %v739 = vpop.permute.xlu0 %738
        %v741 = vsel %vm561, %v737, 0
        %v744 = vsel %vm561, %v739, 0
        %746 = vmatpush.bf16.xpose.msra.mxu0 0
        %747 = vmatpush.bf16.xpose.msra.mxu0 0
        %748 = vmatpush.bf16.xpose.msra.mxu0 0
        %749 = vmatpush.bf16.xpose.msra.mxu0 0
        %750 = vmatpush.bf16.xpose.msra.mxu0 0
        %751 = vmatpush.bf16.xpose.msra.mxu0 0
        %752 = vmatpush.bf16.xpose.msra.mxu0 0
        %753 = vmatpush.bf16.xpose.msra.mxu0 %v744
        %754 = vmatmul.bf16.gmra.mxu0 %v741
        %v755 = vpop.f32.mrf.mxu0
        %v756 = vadd.f32 0.0, %v755
        %v757 = vpop.f32.mrf.mxu0
        %758 = vdwg.mxu0
        %v759 = vmul.f32 %v756, 0.35355338
        %v760 = vadd.f32 %v759, %v583
        %v761 = vsel %vm561, %v760, -inf
        %762 = vmax.xlane.f32.xlu0 %v761
        %v763 = vpop.xlane.xlu0 %762
        %v764 = vsub.f32 %v760, %v763
        %v765 = vmul.f32 %v764, 1.442695
        %v766 = vpow.pop %v765
        %v767 = vsel %vm561, %v766, 0.0
        %768 = vadd.xlane.f32.xlu0 %v767
        %v769 = vpop.xlane.xlu0 %768
        %v770 = vrcp.pop %v769
        %v771 = vmul.f32 %v766, %v770
        %v772 = vpack.c.bf16 %v771, %v771
        %773 = vrot.lane.b32.xlu0 %v558, 40
        %v774 = vpop.permute.xlu0 %773
        %v776 = vsel %vm561, %v772, 0
        %v779 = vsel %vm603, %v774, 0
        %781 = vmatpush.bf16.msra.mxu0 0
        %782 = vmatpush.bf16.msra.mxu0 0
        %783 = vmatpush.bf16.msra.mxu0 0
        %784 = vmatpush.bf16.msra.mxu0 0
        %785 = vmatpush.bf16.msra.mxu0 0
        %786 = vmatpush.bf16.msra.mxu0 0
        %787 = vmatpush.bf16.msra.mxu0 0
        %788 = vmatpush.bf16.msra.mxu0 %v779
        %789 = vmatmul.bf16.gmra.mxu0 %v776
        %v790 = vpop.f32.mrf.mxu0
        %v791 = vadd.f32 0.0, %v790
        %v792 = vpop.f32.mrf.mxu0
        %793 = vdwg.mxu0
        %795 = vrot.lane.b32.xlu0 %v675, 8
        %v796 = vpop.permute.xlu0 %795
        %799 = vrot.lane.b32.xlu0 %v733, 16
        %v800 = vpop.permute.xlu0 %799
        %803 = vrot.lane.b32.xlu0 %v791, 24
        %v804 = vpop.permute.xlu0 %803
        %v806 = vsel %vm561, %v617, %v796
        %vm807 = vcmask 130048
        %v808 = vsel %vm807, %v806, %v800
        %vm809 = vcmask 195584
        %v810 = vsel %vm809, %v808, %v804
        %v811 = vld [vmem:[%s5] sm:$0xf]
        %v812 = vld [vmem:[%s5 + $0x4] sm:$0xf]
        %v813 = vld [vmem:[%s5 + $0x8] sm:$0xf]
        %v814 = vld [vmem:[%s5 + $0xc] sm:$0xf]
        %v815 = vpack.c.bf16 %v810, %v810
        %v816 = vperm.slane %v517, 0
        %v821 = vunpack.c.l.b16 %v811
        %v822 = vunpack.c.l.b16 %v812
        %v823 = vunpack.c.l.b16 %v813
        %v824 = vunpack.c.l.b16 %v814
        %v825 = vpack.c.b16 %v822, %v821
        %v826 = vpack.c.b16 %v824, %v823
        %v830 = vsel %vm480, %v815, 0
        %832 = vmatpush.bf16.msra.mxu0 0
        %833 = vmatpush.bf16.msra.mxu0 0
        %834 = vmatpush.bf16.msra.mxu0 0
        %835 = vmatpush.bf16.msra.mxu0 0
        %836 = vmatpush.bf16.msra.mxu0 0
        %837 = vmatpush.bf16.msra.mxu0 0
        %838 = vmatpush.bf16.msra.mxu0 %v826
        %839 = vmatpush.bf16.msra.mxu0 %v825
        %840 = vmatmul.bf16.gmra.mxu0 %v830
        %v841 = vpop.f32.mrf.mxu0
        %v842 = vadd.f32 %v816, %v841
        %v843 = vpop.f32.mrf.mxu0
        %844 = vdwg.mxu0
        %v845 = vadd.f32 %v842, %v513
        %v846 = vsel %vm480, %v845, 0.0
        %847 = vadd.xlane.f32.xlu0 %v846
        %v848 = vpop.xlane.xlu0 %847
        %v849 = vmul.f32 %v848, %v490
        %v850 = vsub.f32 %v845, %v849
        %v851 = vmul.f32 %v850, %v850
        %v852 = vsel %vm480, %v851, 0.0
        %853 = vadd.xlane.f32.xlu0 %v852
        %v854 = vpop.xlane.xlu0 %853
        %v855 = vmul.f32 %v854, %v490
        %v856 = vadd.f32 %v855, 1e-05
        %v857 = vrsqrt.pop %v856
        %v858 = vmul.f32 %v857, %v856
        %v859 = vmul.f32 %v858, %v857
        %v860 = vmul.f32 0.5, %v859
        %v861 = vsub.f32 1.5, %v860
        %v862 = vmul.f32 %v857, %v861
        %vm863 = vweird.f32 %v856
        %vm864 = vweird.f32 %v857
        %vm865 = vmor %vm863, %vm864
        %v866 = vsel %vm865, %v857, %v862
        %v867 = vmul.f32 %v850, %v866
        %v868 = vperm.slane %v517, 1
        %v869 = vmul.f32 %v867, %v868
        %v870 = vperm.slane %v517, 2
        %v871 = vadd.f32 %v869, %v870
        %v872 = vld [vmem:[%s7] sm:$0xf]
        %v873 = vld [vmem:[%s7 + $0x4] sm:$0xf]
        %v874 = vld [vmem:[%s7 + $0x8] sm:$0xf]
        %v875 = vld [vmem:[%s7 + $0xc] sm:$0xf]
        %v876 = vpack.c.bf16 %v871, %v871
        %v877 = vld [vmem:[%s8] sm:$0x1]
        %v879 = vperm.slane %v877, 0
        %v885 = vunpack.c.l.b16 %v872
        %v886 = vunpack.c.l.b16 %v873
        %v887 = vunpack.c.l.b16 %v874
        %v888 = vunpack.c.l.b16 %v875
        %v889 = vpack.c.b16 %v886, %v885
        %v890 = vpack.c.b16 %v888, %v887
        %v894 = vsel %vm480, %v876, 0
        %896 = vmatpush.bf16.msra.mxu0 0
        %897 = vmatpush.bf16.msra.mxu0 0
        %898 = vmatpush.bf16.msra.mxu0 0
        %899 = vmatpush.bf16.msra.mxu0 0
        %900 = vmatpush.bf16.msra.mxu0 0
        %901 = vmatpush.bf16.msra.mxu0 0
        %902 = vmatpush.bf16.msra.mxu0 %v890
        %903 = vmatpush.bf16.msra.mxu0 %v889
        %904 = vmatmul.bf16.gmra.mxu0 %v894
        %v905 = vpop.f32.mrf.mxu0
        %v906 = vadd.f32 %v879, %v905
        %v907 = vpop.f32.mrf.mxu0
        %908 = vdwg.mxu0
        %v909 = vmul.f32 %v906, 0.5
        %v910 = vmul.f32 %v906, 0.70710677
        %v911 = vmul.f32 %v910, %v910
        %v912 = vmin.f32 16.0, %v911
        %v913 = vmul.f32 %v912, 2.1237322e-06
        %v914 = vadd.f32 %v913, 0.00028619796
        %v915 = vmul.f32 %v912, %v914
        %v916 = vadd.f32 %v915, 0.0036580483
        %v917 = vmul.f32 %v912, %v916
        %v918 = vadd.f32 %v917, 0.05243302
        %v919 = vmul.f32 %v912, %v918
        %v920 = vadd.f32 %v919, 0.18741608
        %v921 = vmul.f32 %v912, %v920
        %v922 = vadd.f32 %v921, 1.1283791
        %v923 = vmul.f32 %v910, %v922
        %v924 = vmul.f32 %v912, 3.8918573e-05
        %v925 = vadd.f32 %v924, 0.001143296
        %v926 = vmul.f32 %v912, %v925
        %v927 = vadd.f32 %v926, 0.014752088
        %v928 = vmul.f32 %v912, %v927
        %v929 = vadd.f32 %v928, 0.112945676
        %v930 = vmul.f32 %v912, %v929
        %v931 = vadd.f32 %v930, 0.4994258
        %v932 = vmul.f32 %v912, %v931
        %v933 = vadd.f32 %v932, 1.0
        %v934 = vrcp.pop %v933
        %v935 = vmul.f32 %v933, %v934
        %v936 = vsub.f32 1.0, %v935
        %v937 = vmul.f32 %v934, %v936
        %v938 = vadd.f32 %v934, %v937
        %vm939 = vweird.f32 %v933
        %vm940 = vweird.f32 %v934
        %vm941 = vmor %vm939, %vm940
        %v942 = vsel %vm941, %v934, %v938
        %v943 = vand.u32 2147483647, %v933
        %vm944 = vcmp.eq.f32.partialorder %v943, 8.507059e+37
        %v945 = vand.u32 %v933, 2147483648
        %v946 = vor.u32 1.1754944e-38, %v945
        %v947 = vsel %vm944, %v946, %v942
        %v948 = vmul.f32 %v923, %v947
        %v949 = vmin.f32 %v948, 1.0
        %v950 = vmax.f32 %v949, -1.0
        %v951 = vadd.f32 %v950, 1.0
        %v952 = vmul.f32 %v909, %v951
        %v953 = vld [vmem:[%s9] sm:$0xf]
        %v954 = vld [vmem:[%s9 + $0x4] sm:$0xf]
        %v955 = vld [vmem:[%s9 + $0x8] sm:$0xf]
        %v956 = vld [vmem:[%s9 + $0xc] sm:$0xf]
        %v957 = vld [vmem:[%s9 + $0x10] sm:$0xf]
        %v958 = vld [vmem:[%s9 + $0x14] sm:$0xf]
        %v959 = vld [vmem:[%s9 + $0x18] sm:$0xf]
        %v960 = vld [vmem:[%s9 + $0x1c] sm:$0xf]
        %v961 = vpack.c.bf16 %v952, %v952
        %v962 = vperm.slane %v517, 3
        %v971 = vunpack.c.l.b16 %v953
        %v972 = vunpack.c.l.b16 %v954
        %v973 = vunpack.c.l.b16 %v955
        %v974 = vunpack.c.l.b16 %v956
        %v975 = vunpack.c.l.b16 %v957
        %v976 = vunpack.c.l.b16 %v958
        %v977 = vunpack.c.l.b16 %v959
        %v978 = vunpack.c.l.b16 %v960
        %v979 = vpack.c.b16 %v972, %v971
        %v980 = vpack.c.b16 %v974, %v973
        %v981 = vpack.c.b16 %v976, %v975
        %v982 = vpack.c.b16 %v978, %v977
        %vm987 = vcmask 523264
        %v989 = vsel %vm987, %v961, 0
        %991 = vmatpush.bf16.msra.mxu0 0
        %992 = vmatpush.bf16.msra.mxu0 0
        %993 = vmatpush.bf16.msra.mxu0 0
        %994 = vmatpush.bf16.msra.mxu0 0
        %995 = vmatpush.bf16.msra.mxu0 %v982
        %996 = vmatpush.bf16.msra.mxu0 %v981
        %997 = vmatpush.bf16.msra.mxu0 %v980
        %998 = vmatpush.bf16.msra.mxu0 %v979
        %999 = vmatmul.bf16.gmra.mxu0 %v989
        %v1000 = vpop.f32.mrf.mxu0
        %v1001 = vadd.f32 %v962, %v1000
        %v1002 = vpop.f32.mrf.mxu0
        %1003 = vdwg.mxu0
        %v1004 = vadd.f32 %v1001, %v871
        %v1005 = vsel %vm480, %v1004, 0.0
        %1006 = vadd.xlane.f32.xlu0 %v1005
        %v1007 = vpop.xlane.xlu0 %1006
        %v1008 = vmul.f32 %v1007, %v490
        %v1009 = vsub.f32 %v1004, %v1008
        %v1010 = vmul.f32 %v1009, %v1009
        %v1011 = vsel %vm480, %v1010, 0.0
        %1012 = vadd.xlane.f32.xlu0 %v1011
        %v1013 = vpop.xlane.xlu0 %1012
        %v1014 = vmul.f32 %v1013, %v490
        %v1015 = vadd.f32 %v1014, 1e-05
        %v1016 = vrsqrt.pop %v1015
        %v1017 = vmul.f32 %v1016, %v1015
        %v1018 = vmul.f32 %v1017, %v1016
        %v1019 = vmul.f32 0.5, %v1018
        %v1020 = vsub.f32 1.5, %v1019
        %v1021 = vmul.f32 %v1016, %v1020
        %vm1022 = vweird.f32 %v1015
        %vm1023 = vweird.f32 %v1016
        %vm1024 = vmor %vm1022, %vm1023
        %v1025 = vsel %vm1024, %v1016, %v1021
        %v1026 = vmul.f32 %v1009, %v1025
        %v1027 = vperm.slane %v517, 4
        %v1028 = vmul.f32 %v1026, %v1027
        %v1029 = vperm.slane %v517, 5
        %v1030 = vadd.f32 %v1028, %v1029
        %s1031 = scalar_lea.vmem %s6, 8
        %v1032 = vld [vmem:[%s1031] sm:$0x3f]
        %s1033 = scalar_lea.vmem %s3, 16
        %v1034 = vld [vmem:[%s1033] sm:$0xf]
        %v1035 = vld [vmem:[%s1033 + $0x4] sm:$0xf]
        %v1036 = vld [vmem:[%s1033 + $0x8] sm:$0xf]
        %v1037 = vld [vmem:[%s1033 + $0xc] sm:$0xf]
        %v1038 = vpack.c.bf16 %v1030, %v1030
        %s1039 = scalar_lea.vmem %s4, 1
        %v1040 = vld [vmem:[%s1039] sm:$0x1]
        %v1042 = vperm.slane %v1040, 0
        %v1048 = vunpack.c.l.b16 %v1034
        %v1049 = vunpack.c.l.b16 %v1035
        %v1050 = vunpack.c.l.b16 %v1036
        %v1051 = vunpack.c.l.b16 %v1037
        %v1052 = vpack.c.b16 %v1049, %v1048
        %v1053 = vpack.c.b16 %v1051, %v1050
        %v1057 = vsel %vm480, %v1038, 0
        %1059 = vmatpush.bf16.msra.mxu0 0
        %1060 = vmatpush.bf16.msra.mxu0 0
        %1061 = vmatpush.bf16.msra.mxu0 0
        %1062 = vmatpush.bf16.msra.mxu0 0
        %1063 = vmatpush.bf16.msra.mxu0 0
        %1064 = vmatpush.bf16.msra.mxu0 0
        %1065 = vmatpush.bf16.msra.mxu0 %v1053
        %1066 = vmatpush.bf16.msra.mxu0 %v1052
        %1067 = vmatmul.bf16.gmra.mxu0 %v1057
        %v1068 = vpop.f32.mrf.mxu0
        %v1069 = vadd.f32 %v1042, %v1068
        %v1070 = vpop.f32.mrf.mxu0
        %1071 = vdwg.mxu0
        %v1072 = vpack.c.bf16 %v1069, %v1069
        %v1074 = vunpack.c.l.b16 %v1072
        %v1075 = vpack.c.b16 %v1074, %v1074
        %1076 = vrot.lane.b32.xlu0 %v1075, 96
        %v1077 = vpop.permute.xlu0 %1076
        %v1079 = vsel %vm561, %v1072, 0
        %v1082 = vsel %vm561, %v1077, 0
        %1084 = vmatpush.bf16.xpose.msra.mxu0 0
        %1085 = vmatpush.bf16.xpose.msra.mxu0 0
        %1086 = vmatpush.bf16.xpose.msra.mxu0 0
        %1087 = vmatpush.bf16.xpose.msra.mxu0 0
        %1088 = vmatpush.bf16.xpose.msra.mxu0 0
        %1089 = vmatpush.bf16.xpose.msra.mxu0 0
        %1090 = vmatpush.bf16.xpose.msra.mxu0 0
        %1091 = vmatpush.bf16.xpose.msra.mxu0 %v1082
        %1092 = vmatmul.bf16.gmra.mxu0 %v1079
        %v1093 = vpop.f32.mrf.mxu0
        %v1094 = vadd.f32 0.0, %v1093
        %v1095 = vpop.f32.mrf.mxu0
        %1096 = vdwg.mxu0
        %v1097 = vmul.f32 %v1094, 0.35355338
        %v1098 = vadd.f32 %v1097, %v583
        %v1099 = vsel %vm561, %v1098, -inf
        %1100 = vmax.xlane.f32.xlu0 %v1099
        %v1101 = vpop.xlane.xlu0 %1100
        %v1102 = vsub.f32 %v1098, %v1101
        %v1103 = vmul.f32 %v1102, 1.442695
        %v1104 = vpow.pop %v1103
        %v1105 = vsel %vm561, %v1104, 0.0
        %1106 = vadd.xlane.f32.xlu0 %v1105
        %v1107 = vpop.xlane.xlu0 %1106
        %v1108 = vrcp.pop %v1107
        %v1109 = vmul.f32 %v1104, %v1108
        %v1110 = vpack.c.bf16 %v1109, %v1109
        %1111 = vrot.lane.b32.xlu0 %v1075, 64
        %v1112 = vpop.permute.xlu0 %1111
        %v1114 = vsel %vm561, %v1110, 0
        %v1117 = vsel %vm603, %v1112, 0
        %1119 = vmatpush.bf16.msra.mxu0 0
        %1120 = vmatpush.bf16.msra.mxu0 0
        %1121 = vmatpush.bf16.msra.mxu0 0
        %1122 = vmatpush.bf16.msra.mxu0 0
        %1123 = vmatpush.bf16.msra.mxu0 0
        %1124 = vmatpush.bf16.msra.mxu0 0
        %1125 = vmatpush.bf16.msra.mxu0 0
        %1126 = vmatpush.bf16.msra.mxu0 %v1117
        %1127 = vmatmul.bf16.gmra.mxu0 %v1114
        %v1128 = vpop.f32.mrf.mxu0
        %v1129 = vadd.f32 0.0, %v1128
        %v1130 = vpop.f32.mrf.mxu0
        %1131 = vdwg.mxu0
        %1132 = vrot.lane.b32.xlu0 %v1075, 120
        %v1133 = vpop.permute.xlu0 %1132
        %1134 = vrot.lane.b32.xlu0 %v1075, 88
        %v1135 = vpop.permute.xlu0 %1134
        %v1137 = vsel %vm561, %v1133, 0
        %v1140 = vsel %vm561, %v1135, 0
        %1142 = vmatpush.bf16.xpose.msra.mxu0 0
        %1143 = vmatpush.bf16.xpose.msra.mxu0 0
        %1144 = vmatpush.bf16.xpose.msra.mxu0 0
        %1145 = vmatpush.bf16.xpose.msra.mxu0 0
        %1146 = vmatpush.bf16.xpose.msra.mxu0 0
        %1147 = vmatpush.bf16.xpose.msra.mxu0 0
        %1148 = vmatpush.bf16.xpose.msra.mxu0 0
        %1149 = vmatpush.bf16.xpose.msra.mxu0 %v1140
        %1150 = vmatmul.bf16.gmra.mxu0 %v1137
        %v1151 = vpop.f32.mrf.mxu0
        %v1152 = vadd.f32 0.0, %v1151
        %v1153 = vpop.f32.mrf.mxu0
        %1154 = vdwg.mxu0
        %v1155 = vmul.f32 %v1152, 0.35355338
        %v1156 = vadd.f32 %v1155, %v583
        %v1157 = vsel %vm561, %v1156, -inf
        %1158 = vmax.xlane.f32.xlu0 %v1157
        %v1159 = vpop.xlane.xlu0 %1158
        %v1160 = vsub.f32 %v1156, %v1159
        %v1161 = vmul.f32 %v1160, 1.442695
        %v1162 = vpow.pop %v1161
        %v1163 = vsel %vm561, %v1162, 0.0
        %1164 = vadd.xlane.f32.xlu0 %v1163
        %v1165 = vpop.xlane.xlu0 %1164
        %v1166 = vrcp.pop %v1165
        %v1167 = vmul.f32 %v1162, %v1166
        %v1168 = vpack.c.bf16 %v1167, %v1167
        %1169 = vrot.lane.b32.xlu0 %v1075, 56
        %v1170 = vpop.permute.xlu0 %1169
        %v1172 = vsel %vm561, %v1168, 0
        %v1175 = vsel %vm603, %v1170, 0
        %1177 = vmatpush.bf16.msra.mxu0 0
        %1178 = vmatpush.bf16.msra.mxu0 0
        %1179 = vmatpush.bf16.msra.mxu0 0
        %1180 = vmatpush.bf16.msra.mxu0 0
        %1181 = vmatpush.bf16.msra.mxu0 0
        %1182 = vmatpush.bf16.msra.mxu0 0
        %1183 = vmatpush.bf16.msra.mxu0 0
        %1184 = vmatpush.bf16.msra.mxu0 %v1175
        %1185 = vmatmul.bf16.gmra.mxu0 %v1172
        %v1186 = vpop.f32.mrf.mxu0
        %v1187 = vadd.f32 0.0, %v1186
        %v1188 = vpop.f32.mrf.mxu0
        %1189 = vdwg.mxu0
        %1190 = vrot.lane.b32.xlu0 %v1075, 112
        %v1191 = vpop.permute.xlu0 %1190
        %1192 = vrot.lane.b32.xlu0 %v1075, 80
        %v1193 = vpop.permute.xlu0 %1192
        %v1195 = vsel %vm561, %v1191, 0
        %v1198 = vsel %vm561, %v1193, 0
        %1200 = vmatpush.bf16.xpose.msra.mxu0 0
        %1201 = vmatpush.bf16.xpose.msra.mxu0 0
        %1202 = vmatpush.bf16.xpose.msra.mxu0 0
        %1203 = vmatpush.bf16.xpose.msra.mxu0 0
        %1204 = vmatpush.bf16.xpose.msra.mxu0 0
        %1205 = vmatpush.bf16.xpose.msra.mxu0 0
        %1206 = vmatpush.bf16.xpose.msra.mxu0 0
        %1207 = vmatpush.bf16.xpose.msra.mxu0 %v1198
        %1208 = vmatmul.bf16.gmra.mxu0 %v1195
        %v1209 = vpop.f32.mrf.mxu0
        %v1210 = vadd.f32 0.0, %v1209
        %v1211 = vpop.f32.mrf.mxu0
        %1212 = vdwg.mxu0
        %v1213 = vmul.f32 %v1210, 0.35355338
        %v1214 = vadd.f32 %v1213, %v583
        %v1215 = vsel %vm561, %v1214, -inf
        %1216 = vmax.xlane.f32.xlu0 %v1215
        %v1217 = vpop.xlane.xlu0 %1216
        %v1218 = vsub.f32 %v1214, %v1217
        %v1219 = vmul.f32 %v1218, 1.442695
        %v1220 = vpow.pop %v1219
        %v1221 = vsel %vm561, %v1220, 0.0
        %1222 = vadd.xlane.f32.xlu0 %v1221
        %v1223 = vpop.xlane.xlu0 %1222
        %v1224 = vrcp.pop %v1223
        %v1225 = vmul.f32 %v1220, %v1224
        %v1226 = vpack.c.bf16 %v1225, %v1225
        %1227 = vrot.lane.b32.xlu0 %v1075, 48
        %v1228 = vpop.permute.xlu0 %1227
        %v1230 = vsel %vm561, %v1226, 0
        %v1233 = vsel %vm603, %v1228, 0
        %1235 = vmatpush.bf16.msra.mxu0 0
        %1236 = vmatpush.bf16.msra.mxu0 0
        %1237 = vmatpush.bf16.msra.mxu0 0
        %1238 = vmatpush.bf16.msra.mxu0 0
        %1239 = vmatpush.bf16.msra.mxu0 0
        %1240 = vmatpush.bf16.msra.mxu0 0
        %1241 = vmatpush.bf16.msra.mxu0 0
        %1242 = vmatpush.bf16.msra.mxu0 %v1233
        %1243 = vmatmul.bf16.gmra.mxu0 %v1230
        %v1244 = vpop.f32.mrf.mxu0
        %v1245 = vadd.f32 0.0, %v1244
        %v1246 = vpop.f32.mrf.mxu0
        %1247 = vdwg.mxu0
        %1248 = vrot.lane.b32.xlu0 %v1075, 104
        %v1249 = vpop.permute.xlu0 %1248
        %1250 = vrot.lane.b32.xlu0 %v1075, 72
        %v1251 = vpop.permute.xlu0 %1250
        %v1253 = vsel %vm561, %v1249, 0
        %v1256 = vsel %vm561, %v1251, 0
        %1258 = vmatpush.bf16.xpose.msra.mxu0 0
        %1259 = vmatpush.bf16.xpose.msra.mxu0 0
        %1260 = vmatpush.bf16.xpose.msra.mxu0 0
        %1261 = vmatpush.bf16.xpose.msra.mxu0 0
        %1262 = vmatpush.bf16.xpose.msra.mxu0 0
        %1263 = vmatpush.bf16.xpose.msra.mxu0 0
        %1264 = vmatpush.bf16.xpose.msra.mxu0 0
        %1265 = vmatpush.bf16.xpose.msra.mxu0 %v1256
        %1266 = vmatmul.bf16.gmra.mxu0 %v1253
        %v1267 = vpop.f32.mrf.mxu0
        %v1268 = vadd.f32 0.0, %v1267
        %v1269 = vpop.f32.mrf.mxu0
        %1270 = vdwg.mxu0
        %v1271 = vmul.f32 %v1268, 0.35355338
        %v1272 = vadd.f32 %v1271, %v583
        %v1273 = vsel %vm561, %v1272, -inf
        %1274 = vmax.xlane.f32.xlu0 %v1273
        %v1275 = vpop.xlane.xlu0 %1274
        %v1276 = vsub.f32 %v1272, %v1275
        %v1277 = vmul.f32 %v1276, 1.442695
        %v1278 = vpow.pop %v1277
        %v1279 = vsel %vm561, %v1278, 0.0
        %1280 = vadd.xlane.f32.xlu0 %v1279
        %v1281 = vpop.xlane.xlu0 %1280
        %v1282 = vrcp.pop %v1281
        %v1283 = vmul.f32 %v1278, %v1282
        %v1284 = vpack.c.bf16 %v1283, %v1283
        %1285 = vrot.lane.b32.xlu0 %v1075, 40
        %v1286 = vpop.permute.xlu0 %1285
        %v1288 = vsel %vm561, %v1284, 0
        %v1291 = vsel %vm603, %v1286, 0
        %1293 = vmatpush.bf16.msra.mxu0 0
        %1294 = vmatpush.bf16.msra.mxu0 0
        %1295 = vmatpush.bf16.msra.mxu0 0
        %1296 = vmatpush.bf16.msra.mxu0 0
        %1297 = vmatpush.bf16.msra.mxu0 0
        %1298 = vmatpush.bf16.msra.mxu0 0
        %1299 = vmatpush.bf16.msra.mxu0 0
        %1300 = vmatpush.bf16.msra.mxu0 %v1291
        %1301 = vmatmul.bf16.gmra.mxu0 %v1288
        %v1302 = vpop.f32.mrf.mxu0
        %v1303 = vadd.f32 0.0, %v1302
        %v1304 = vpop.f32.mrf.mxu0
        %1305 = vdwg.mxu0
        %1307 = vrot.lane.b32.xlu0 %v1187, 8
        %v1308 = vpop.permute.xlu0 %1307
        %1311 = vrot.lane.b32.xlu0 %v1245, 16
        %v1312 = vpop.permute.xlu0 %1311
        %1315 = vrot.lane.b32.xlu0 %v1303, 24
        %v1316 = vpop.permute.xlu0 %1315
        %v1318 = vsel %vm561, %v1129, %v1308
        %v1319 = vsel %vm807, %v1318, %v1312
        %v1320 = vsel %vm809, %v1319, %v1316
        %s1321 = scalar_lea.vmem %s5, 16
        %v1322 = vld [vmem:[%s1321] sm:$0xf]
        %v1323 = vld [vmem:[%s1321 + $0x4] sm:$0xf]
        %v1324 = vld [vmem:[%s1321 + $0x8] sm:$0xf]
        %v1325 = vld [vmem:[%s1321 + $0xc] sm:$0xf]
        %v1326 = vpack.c.bf16 %v1320, %v1320
        %v1327 = vperm.slane %v1032, 0
        %v1332 = vunpack.c.l.b16 %v1322
        %v1333 = vunpack.c.l.b16 %v1323
        %v1334 = vunpack.c.l.b16 %v1324
        %v1335 = vunpack.c.l.b16 %v1325
        %v1336 = vpack.c.b16 %v1333, %v1332
        %v1337 = vpack.c.b16 %v1335, %v1334
        %v1341 = vsel %vm480, %v1326, 0
        %1343 = vmatpush.bf16.msra.mxu0 0
        %1344 = vmatpush.bf16.msra.mxu0 0
        %1345 = vmatpush.bf16.msra.mxu0 0
        %1346 = vmatpush.bf16.msra.mxu0 0
        %1347 = vmatpush.bf16.msra.mxu0 0
        %1348 = vmatpush.bf16.msra.mxu0 0
        %1349 = vmatpush.bf16.msra.mxu0 %v1337
        %1350 = vmatpush.bf16.msra.mxu0 %v1336
        %1351 = vmatmul.bf16.gmra.mxu0 %v1341
        %v1352 = vpop.f32.mrf.mxu0
        %v1353 = vadd.f32 %v1327, %v1352
        %v1354 = vpop.f32.mrf.mxu0
        %1355 = vdwg.mxu0
        %v1356 = vadd.f32 %v1353, %v1030
        %v1357 = vsel %vm480, %v1356, 0.0
        %1358 = vadd.xlane.f32.xlu0 %v1357
        %v1359 = vpop.xlane.xlu0 %1358
        %v1360 = vmul.f32 %v1359, %v490
        %v1361 = vsub.f32 %v1356, %v1360
        %v1362 = vmul.f32 %v1361, %v1361
        %v1363 = vsel %vm480, %v1362, 0.0
        %1364 = vadd.xlane.f32.xlu0 %v1363
        %v1365 = vpop.xlane.xlu0 %1364
        %v1366 = vmul.f32 %v1365, %v490
        %v1367 = vadd.f32 %v1366, 1e-05
        %v1368 = vrsqrt.pop %v1367
        %v1369 = vmul.f32 %v1368, %v1367
        %v1370 = vmul.f32 %v1369, %v1368
        %v1371 = vmul.f32 0.5, %v1370
        %v1372 = vsub.f32 1.5, %v1371
        %v1373 = vmul.f32 %v1368, %v1372
        %vm1374 = vweird.f32 %v1367
        %vm1375 = vweird.f32 %v1368
        %vm1376 = vmor %vm1374, %vm1375
        %v1377 = vsel %vm1376, %v1368, %v1373
        %v1378 = vmul.f32 %v1361, %v1377
        %v1379 = vperm.slane %v1032, 1
        %v1380 = vmul.f32 %v1378, %v1379
        %v1381 = vperm.slane %v1032, 2
        %v1382 = vadd.f32 %v1380, %v1381
        %s1383 = scalar_lea.vmem %s7, 16
        %v1384 = vld [vmem:[%s1383] sm:$0xf]
        %v1385 = vld [vmem:[%s1383 + $0x4] sm:$0xf]
        %v1386 = vld [vmem:[%s1383 + $0x8] sm:$0xf]
        %v1387 = vld [vmem:[%s1383 + $0xc] sm:$0xf]
        %v1388 = vpack.c.bf16 %v1382, %v1382
        %s1389 = scalar_lea.vmem %s8, 1
        %v1390 = vld [vmem:[%s1389] sm:$0x1]
        %v1392 = vperm.slane %v1390, 0
        %v1398 = vunpack.c.l.b16 %v1384
        %v1399 = vunpack.c.l.b16 %v1385
        %v1400 = vunpack.c.l.b16 %v1386
        %v1401 = vunpack.c.l.b16 %v1387
        %v1402 = vpack.c.b16 %v1399, %v1398
        %v1403 = vpack.c.b16 %v1401, %v1400
        %v1407 = vsel %vm480, %v1388, 0
        %1409 = vmatpush.bf16.msra.mxu0 0
        %1410 = vmatpush.bf16.msra.mxu0 0
        %1411 = vmatpush.bf16.msra.mxu0 0
        %1412 = vmatpush.bf16.msra.mxu0 0
        %1413 = vmatpush.bf16.msra.mxu0 0
        %1414 = vmatpush.bf16.msra.mxu0 0
        %1415 = vmatpush.bf16.msra.mxu0 %v1403
        %1416 = vmatpush.bf16.msra.mxu0 %v1402
        %1417 = vmatmul.bf16.gmra.mxu0 %v1407
        %v1418 = vpop.f32.mrf.mxu0
        %v1419 = vadd.f32 %v1392, %v1418
        %v1420 = vpop.f32.mrf.mxu0
        %1421 = vdwg.mxu0
        %v1422 = vmul.f32 %v1419, 0.5
        %v1423 = vmul.f32 %v1419, 0.70710677
        %v1424 = vmul.f32 %v1423, %v1423
        %v1425 = vmin.f32 16.0, %v1424
        %v1426 = vmul.f32 %v1425, 2.1237322e-06
        %v1427 = vadd.f32 %v1426, 0.00028619796
        %v1428 = vmul.f32 %v1425, %v1427
        %v1429 = vadd.f32 %v1428, 0.0036580483
        %v1430 = vmul.f32 %v1425, %v1429
        %v1431 = vadd.f32 %v1430, 0.05243302
        %v1432 = vmul.f32 %v1425, %v1431
        %v1433 = vadd.f32 %v1432, 0.18741608
        %v1434 = vmul.f32 %v1425, %v1433
        %v1435 = vadd.f32 %v1434, 1.1283791
        %v1436 = vmul.f32 %v1423, %v1435
        %v1437 = vmul.f32 %v1425, 3.8918573e-05
        %v1438 = vadd.f32 %v1437, 0.001143296
        %v1439 = vmul.f32 %v1425, %v1438
        %v1440 = vadd.f32 %v1439, 0.014752088
        %v1441 = vmul.f32 %v1425, %v1440
        %v1442 = vadd.f32 %v1441, 0.112945676
        %v1443 = vmul.f32 %v1425, %v1442
        %v1444 = vadd.f32 %v1443, 0.4994258
        %v1445 = vmul.f32 %v1425, %v1444
        %v1446 = vadd.f32 %v1445, 1.0
        %v1447 = vrcp.pop %v1446
        %v1448 = vmul.f32 %v1446, %v1447
        %v1449 = vsub.f32 1.0, %v1448
        %v1450 = vmul.f32 %v1447, %v1449
        %v1451 = vadd.f32 %v1447, %v1450
        %vm1452 = vweird.f32 %v1446
        %vm1453 = vweird.f32 %v1447
        %vm1454 = vmor %vm1452, %vm1453
        %v1455 = vsel %vm1454, %v1447, %v1451
        %v1456 = vand.u32 2147483647, %v1446
        %vm1457 = vcmp.eq.f32.partialorder %v1456, 8.507059e+37
        %v1458 = vand.u32 %v1446, 2147483648
        %v1459 = vor.u32 1.1754944e-38, %v1458
        %v1460 = vsel %vm1457, %v1459, %v1455
        %v1461 = vmul.f32 %v1436, %v1460
        %v1462 = vmin.f32 %v1461, 1.0
        %v1463 = vmax.f32 %v1462, -1.0
        %v1464 = vadd.f32 %v1463, 1.0
        %v1465 = vmul.f32 %v1422, %v1464
        %s1466 = scalar_lea.vmem %s9, 32
        %v1467 = vld [vmem:[%s1466] sm:$0xf]
        %v1468 = vld [vmem:[%s1466 + $0x4] sm:$0xf]
        %v1469 = vld [vmem:[%s1466 + $0x8] sm:$0xf]
        %v1470 = vld [vmem:[%s1466 + $0xc] sm:$0xf]
        %v1471 = vld [vmem:[%s1466 + $0x10] sm:$0xf]
        %v1472 = vld [vmem:[%s1466 + $0x14] sm:$0xf]
        %v1473 = vld [vmem:[%s1466 + $0x18] sm:$0xf]
        %v1474 = vld [vmem:[%s1466 + $0x1c] sm:$0xf]
        %v1475 = vpack.c.bf16 %v1465, %v1465
        %v1476 = vperm.slane %v1032, 3
        %v1485 = vunpack.c.l.b16 %v1467
        %v1486 = vunpack.c.l.b16 %v1468
        %v1487 = vunpack.c.l.b16 %v1469
        %v1488 = vunpack.c.l.b16 %v1470
        %v1489 = vunpack.c.l.b16 %v1471
        %v1490 = vunpack.c.l.b16 %v1472
        %v1491 = vunpack.c.l.b16 %v1473
        %v1492 = vunpack.c.l.b16 %v1474
        %v1493 = vpack.c.b16 %v1486, %v1485
        %v1494 = vpack.c.b16 %v1488, %v1487
        %v1495 = vpack.c.b16 %v1490, %v1489
        %v1496 = vpack.c.b16 %v1492, %v1491
        %v1502 = vsel %vm987, %v1475, 0
        %1504 = vmatpush.bf16.msra.mxu0 0
        %1505 = vmatpush.bf16.msra.mxu0 0
        %1506 = vmatpush.bf16.msra.mxu0 0
        %1507 = vmatpush.bf16.msra.mxu0 0
        %1508 = vmatpush.bf16.msra.mxu0 %v1496
        %1509 = vmatpush.bf16.msra.mxu0 %v1495
        %1510 = vmatpush.bf16.msra.mxu0 %v1494
        %1511 = vmatpush.bf16.msra.mxu0 %v1493
        %1512 = vmatmul.bf16.gmra.mxu0 %v1502
        %v1513 = vpop.f32.mrf.mxu0
        %v1514 = vadd.f32 %v1476, %v1513
        %v1515 = vpop.f32.mrf.mxu0
        %1516 = vdwg.mxu0
        %v1517 = vadd.f32 %v1514, %v1382
        %v1518 = vsel %vm480, %v1517, 0.0
        %1519 = vadd.xlane.f32.xlu0 %v1518
        %v1520 = vpop.xlane.xlu0 %1519
        %v1521 = vmul.f32 %v1520, %v490
        %v1522 = vsub.f32 %v1517, %v1521
        %v1523 = vmul.f32 %v1522, %v1522
        %v1524 = vsel %vm480, %v1523, 0.0
        %1525 = vadd.xlane.f32.xlu0 %v1524
        %v1526 = vpop.xlane.xlu0 %1525
        %v1527 = vmul.f32 %v1526, %v490
        %v1528 = vadd.f32 %v1527, 1e-05
        %v1529 = vrsqrt.pop %v1528
        %v1530 = vmul.f32 %v1529, %v1528
        %v1531 = vmul.f32 %v1530, %v1529
        %v1532 = vmul.f32 0.5, %v1531
        %v1533 = vsub.f32 1.5, %v1532
        %v1534 = vmul.f32 %v1529, %v1533
        %vm1535 = vweird.f32 %v1528
        %vm1536 = vweird.f32 %v1529
        %vm1537 = vmor %vm1535, %vm1536
        %v1538 = vsel %vm1537, %v1529, %v1534
        %v1539 = vmul.f32 %v1522, %v1538
        %v1540 = vperm.slane %v1032, 4
        %v1541 = vmul.f32 %v1539, %v1540
        %v1542 = vperm.slane %v1032, 5
        %v1543 = vadd.f32 %v1541, %v1542
        %v1544 = vld [vmem:[%s10] sm:$0xf]
        %v1545 = vld [vmem:[%s10 + $0x4] sm:$0xf]
        %v1546 = vld [vmem:[%s10 + $0x8] sm:$0xf]
        %v1547 = vld [vmem:[%s10 + $0xc] sm:$0xf]
        %v1548 = vpack.c.bf16 %v1543, %v1543
        %v1549 = vld [vmem:[%s11] sm:$0x1]
        %v1554 = vunpack.c.l.b16 %v1544
        %v1555 = vunpack.c.l.b16 %v1545
        %v1556 = vunpack.c.l.b16 %v1546
        %v1557 = vunpack.c.l.b16 %v1547
        %v1558 = vpack.c.b16 %v1555, %v1554
        %v1559 = vpack.c.b16 %v1557, %v1556
        %v1563 = vsel %vm480, %v1548, 0
        %1565 = vmatpush.bf16.msra.mxu0 0
        %1566 = vmatpush.bf16.msra.mxu0 0
        %1567 = vmatpush.bf16.msra.mxu0 0
        %1568 = vmatpush.bf16.msra.mxu0 0
        %1569 = vmatpush.bf16.msra.mxu0 0
        %1570 = vmatpush.bf16.msra.mxu0 0
        %1571 = vmatpush.bf16.msra.mxu0 %v1559
        %1572 = vmatpush.bf16.msra.mxu0 %v1558
        %1573 = vmatmul.bf16.gmra.mxu0 %v1563
        %v1574 = vpop.f32.mrf.mxu0
        %v1575 = vadd.f32 %v1549, %v1574
        %v1576 = vpop.f32.mrf.mxu0
        %1577 = vdwg.mxu0
        %v1578 = vtanh.pop %v1575
        %v1579 = vld [vmem:[%s12] sm:$0xf]
        %v1580 = vld [vmem:[%s12 + $0x4] sm:$0xf]
        %v1581 = vld [vmem:[%s12 + $0x8] sm:$0xf]
        %v1582 = vld [vmem:[%s12 + $0xc] sm:$0xf]
        %v1583 = vpack.c.bf16 %v1578, %v1578
        %v1584 = vld [vmem:[%s13] sm:$0x1]
        %v1589 = vunpack.c.l.b16 %v1579
        %v1590 = vunpack.c.l.b16 %v1580
        %v1591 = vunpack.c.l.b16 %v1581
        %v1592 = vunpack.c.l.b16 %v1582
        %v1593 = vpack.c.b16 %v1590, %v1589
        %v1594 = vpack.c.b16 %v1592, %v1591
        %v1598 = vsel %vm480, %v1583, 0
        %1600 = vmatpush.bf16.msra.mxu0 0
        %1601 = vmatpush.bf16.msra.mxu0 0
        %1602 = vmatpush.bf16.msra.mxu0 0
        %1603 = vmatpush.bf16.msra.mxu0 0
        %1604 = vmatpush.bf16.msra.mxu0 0
        %1605 = vmatpush.bf16.msra.mxu0 0
        %1606 = vmatpush.bf16.msra.mxu0 %v1594
        %1607 = vmatpush.bf16.msra.mxu0 %v1593
        %1608 = vmatmul.bf16.gmra.mxu0 %v1598
        %v1609 = vpop.f32.mrf.mxu0
        %v1610 = vadd.f32 %v1584, %v1609
        %v1611 = vpop.f32.mrf.mxu0
        %1612 = vdwg.mxu0
        %vm1613 = vcmask 8192
        %1614 = vst.msk [vmem:[%s468] sm:$0x1] %vm1613, %v1610
        %s1615 = sand.u32 %s340, 1
        %s1616 = scalar_lea.sflag [#allocation3], %s1615
        %s1617 = sand.u32 %s340, 1
        %s1618 = scalar_lea.vmem [#allocation2], %s1617
        // Predicated region
        $region77: #{roberta_forward.1} parent=75 // pred_check
          %p1619 = pneg %p350
        $region78: #{roberta_forward.1} parent=75 // pred_check_branch
          %1621 = sbr.rel (%p1619) target = $region80
        $region79: #{roberta_forward.1} parent=75 // pred_region
          %1623 = vsyncadd %s1616, 0
          %s1624 = scalar_lea.hbm %s14, %s28
          %s1626 = sshll.u32 %s1618, 4
          %s1627 = int_to_ptr.vmem [resolvable:$true] %s1626
          %s1628 = sshll.u32 %s1624, 4
          %s1629 = int_to_ptr.hbm [resolvable:$true] %s1628
          %1631 = dma.vmem_to_hbm [thread:$0]  %s1627, 16, %s1629, %s1616
        $region80: #{roberta_forward.1} parent=75 // pred_fallthru
          _
      $region76: #{roberta_forward.1} parent=5 // pred_fallthru
        _
      %p1632 = scmp.le.s32.totalorder 2, %s23
      // Predicated region
      $region81: #{roberta_forward.1} parent=5 // pred_check
        %p1633 = pneg %p1632
      $region82: #{roberta_forward.1} parent=5 // pred_check_branch
        %1635 = sbr.rel (%p1633) target = $region84
      $region83: #{roberta_forward.1} parent=5 // pred_region
        %s1636 = ssub.s32 %s23, 2
        // Predicated region
        $region85: #{roberta_forward.1} parent=83 // pred_check
          %p1637 = pneg %p356
        $region86: #{roberta_forward.1} parent=83 // pred_check_branch
          %1639 = sbr.rel (%p1637) target = $region88
        $region87: #{roberta_forward.1} parent=83 // pred_region
          %s1640 = sand.u32 %s341, 1
          %s1641 = scalar_lea.sflag [#allocation3], %s1640
          %s1642 = sand.u32 %s341, 1
          %s1643 = scalar_lea.vmem [#allocation2], %s1642
          %1645 = dma.done %s1641, 16
        $region88: #{roberta_forward.1} parent=83 // pred_fallthru
          _
      $region84: #{roberta_forward.1} parent=5 // pred_fallthru
        _
    $region6: #{roberta_forward.1} parent=1 // loop_footer
      %s27 = sadd.s32 1, %s23
    $region7: #{roberta_forward.1} parent=1 // loop_footer_branch
      %22 = sbr.rel target = $region3
    $region8: #{roberta_forward.1} parent=1 // loop_exit
      _
    %1646 = vsyncpa [#allocation3], 1
    %s1647 = scalar_lea.sflag [#allocation3], 1
    %1648 = vsyncpa %s1647, 1

</llo_original>
